<compile_context>
chip_gen: v6e
topology: v6e:2x2x1
jax: 0.10.0
libtpu: 0.0.40
codegen_flags: <defaults>
</compile_context>

<pallas_src>
import functools

import jax
import jax.numpy as jnp
from jax import lax
from jax.experimental import pallas as pl
from jax.experimental.pallas import tpu as pltpu


def _round_up(v, m):
    return (v + m - 1) // m * m


def _chip_info():
    """Best-effort VMEM capacity + bf16-VPU/EUP availability."""
    vmem_cap = None
    bf16_math_ok = True
    kind = ""
    try:
        kind = jax.devices()[0].device_kind.lower()
    except Exception:
        pass
    if "v5" in kind:
        bf16_math_ok = False          # no bf16 VPU/EUP on v5e
    try:
        info = pltpu.get_tpu_info()
        cap = int(getattr(info, "vmem_capacity_bytes", 0))
        if cap > 0:
            vmem_cap = cap
    except Exception:
        pass
    if vmem_cap is None:
        # v5e/v6e: 128 MiB per core; v7x: 64 MiB. Be conservative when unknown.
        vmem_cap = (128 << 20) if ("v5" in kind or "v6" in kind) else (64 << 20)
    return vmem_cap, bf16_math_ok


_VMEM_CAP, _BF16_EXP_OK = _chip_info()


# --------------------------------------------------------------------------- #
# Kernel 1: feature projection + per-head source / destination attn logits.
# --------------------------------------------------------------------------- #
def _project_kernel(x_ref, w1_ref, asrc_ref, adst_ref,
                    hbf_ref, asrc_row_ref, adst_col_ref):
    h = jnp.dot(x_ref[...], w1_ref[...], preferred_element_type=jnp.float32)
    hbf_ref[...] = h.astype(jnp.bfloat16)
    # block-padded attention vectors: row hh only covers head hh's lane range,
    # so a whole-slab contraction gives the per-head logits directly.
    asrc_row_ref[...] = lax.dot_general(            # [heads, tm]
        asrc_ref[...], h, (((1,), (1,)), ((), ())),
        preferred_element_type=jnp.float32)
    adst_col_ref[...] = lax.dot_general(            # [tm, heads]
        h, adst_ref[...], (((1,), (1,)), ((), ())),
        preferred_element_type=jnp.float32)


# --------------------------------------------------------------------------- #
# Kernel 2: GAT attention (online softmax over src tiles) + bias/ReLU + GCN
#           projection pre-scaled by deg_src^-1/2.
# --------------------------------------------------------------------------- #
def _gat_gcn_kernel(adj_ref, hbf_ref, asrc_ref, adst_ref, b1_ref, w2_ref,
                    dinv_ref, z_ref, m_sc, l_sc, acc_sc, *,
                    heads, hidden, slope, bf16_exp):
    j = pl.program_id(1)

    @pl.when(j == 0)
    def _():
        m_sc[...] = jnp.full_like(m_sc, -jnp.inf)
        l_sc[...] = jnp.zeros_like(l_sc)
        acc_sc[...] = jnp.zeros_like(acc_sc)

    adj_t = adj_ref[...]                                   # [tm, ts] bf16 (0/1)
    hbf = hbf_ref[...]                                     # [ts, hd2] bf16

    for hh in range(heads):
        sl = slice(hh * hidden, (hh + 1) * hidden)
        a_dst = adst_ref[:, hh:hh + 1]                     # [tm, 1]  f32
        a_src = asrc_ref[hh:hh + 1, :]                     # [1, ts]  f32
        e = a_dst + a_src                                  # e[dst, src]
        e = jnp.maximum(e, slope * e)                      # LeakyReLU(0.2)

        m_prev = m_sc[hh]                                  # [tm, 1]
        m_new = jnp.maximum(m_prev, jnp.max(e, axis=-1, keepdims=True))
        alpha = jnp.exp(m_prev - m_new)                    # rescale old state

        if bf16_exp:
            # bf16 exp + multiplicative mask (v6e/v7x); denominator stays f32.
            p = adj_t * jnp.exp((e - m_new).astype(jnp.bfloat16))
            row_sum = jnp.sum(p.astype(jnp.float32), axis=-1, keepdims=True)
        else:
            pf = adj_t.astype(jnp.float32) * jnp.exp(e - m_new)
            row_sum = jnp.sum(pf, axis=-1, keepdims=True)
            p = pf.astype(jnp.bfloat16)

        l_sc[hh] = alpha * l_sc[hh] + row_sum
        m_sc[hh] = m_new
        # aggregate only this head's hidden slice (bf16 MXU, f32 accumulate)
        part = jnp.dot(p, hbf[:, sl], preferred_element_type=jnp.float32)
        acc_sc[:, sl] = alpha * acc_sc[:, sl] + part

    @pl.when(j == pl.num_programs(1) - 1)
    def _():
        # per-head softmax normalisation; zero-degree (padded) rows stay zero.
        for hh in range(heads):
            sl = slice(hh * hidden, (hh + 1) * hidden)
            inv = pl.reciprocal(jnp.maximum(l_sc[hh], 1e-20), approx=True)
            acc_sc[:, sl] = acc_sc[:, sl] * inv
        h1 = jnp.maximum(acc_sc[...] + b1_ref[...], 0.0)   # concat bias + ReLU
        # dropout(p=0) is the identity -> nothing to do.
        z = jnp.dot(h1, w2_ref[...], preferred_element_type=jnp.float32)
        z_ref[...] = (z * dinv_ref[...]).astype(jnp.bfloat16)


# --------------------------------------------------------------------------- #
# Kernel 3: GCN aggregation (src-tiled accumulate) + bias + log_softmax.
# --------------------------------------------------------------------------- #
def _gcn_out_kernel(adj_ref, z_ref, b2_ref, dinv_ref, o_ref, acc_sc):
    j = pl.program_id(1)

    @pl.when(j == 0)
    def _():
        acc_sc[...] = jnp.zeros_like(acc_sc)

    acc_sc[...] += jnp.dot(adj_ref[...], z_ref[...],
                           preferred_element_type=jnp.float32)

    @pl.when(j == pl.num_programs(1) - 1)
    def _():
        zt = dinv_ref[...] * acc_sc[...] + b2_ref[...]     # padded lanes: -1e9
        m = jnp.max(zt, axis=-1, keepdims=True)
        zs = zt - m
        lse = jnp.log(jnp.sum(jnp.exp(zs), axis=-1, keepdims=True))
        o_ref[...] = zs - lse


# --------------------------------------------------------------------------- #
# Wrapper.
# --------------------------------------------------------------------------- #
@functools.partial(jax.jit, static_argnames=("hidden_dim", "num_classes",
                                              "tile_m", "tile_s", "bf16_exp"))
def _gat_forward_impl(x, adj, params, *, hidden_dim, num_classes, tile_m,
                      tile_s, bf16_exp):
    n, f = x.shape
    heads = params["att_src"].shape[0]
    hd2 = heads * hidden_dim
    cpad = _round_up(max(num_classes, 128), 128)

    # --- destination / source tiling -----------------------------------------
    n8 = _round_up(n, 8)
    if n8 <= tile_m:
        tm = ts = n_pad = n8
    else:
        tm = _round_up(min(tile_m, n8), 128)
        ts = max(tm, min(tile_s, _round_up(n8, tm)) // tm * tm)  # multiple of tm
        n_pad = _round_up(n8, ts)
    nt, ns = n_pad // tm, n_pad // ts

    # --- host-side layout prep ------------------------------------------------
    x_p = jnp.pad(x.astype(jnp.float32), ((0, n_pad - n), (0, 0)))
    adj_f = jnp.pad(adj.astype(jnp.float32), ((0, n_pad - n), (0, n_pad - n)))
    adj_p = adj_f.astype(jnp.bfloat16)          # 0/1 entries are exact in bf16

    # deg^-1/2 (source = column sums, destination = row sums); zero-degree
    # padded nodes are zeroed so padded rows contribute nothing downstream.
    def inv_sqrt(deg):
        return jnp.where(deg > 0, lax.rsqrt(jnp.maximum(deg, 1e-12)),
                         0.0).reshape(n_pad, 1)

    dinv_src = inv_sqrt(jnp.sum(adj_f, axis=0))
    dinv_dst = inv_sqrt(jnp.sum(adj_f, axis=1))

    # block-padded attention vectors: row hh holds att[hh] in its own lane range
    def block_att(att):
        blk = jnp.zeros((heads, hd2), jnp.float32)
        for hh in range(heads):
            blk = blk.at[hh, hh * hidden_dim:(hh + 1) * hidden_dim].set(att[hh])
        return blk

    asrc_blk = block_att(params["att_src"].astype(jnp.float32))
    adst_blk = block_att(params["att_dst"].astype(jnp.float32))
    b1 = params["b1"].reshape(1, hd2).astype(jnp.float32)
    w1 = params["w1"].astype(jnp.float32)

    # lane-dense (128-padded) GCN weights / bias; padded class logits -> -1e9.
    w2_pad = jnp.zeros((hd2, cpad), jnp.float32)
    w2_pad = w2_pad.at[:, :num_classes].set(params["w2"].astype(jnp.float32))
    b2_pad = jnp.full((1, cpad), -1e9, jnp.float32)
    b2_pad = b2_pad.at[:, :num_classes].set(
        params["b2"].reshape(1, num_classes).astype(jnp.float32))

    def compiler_params(sem, est_bytes):
        vmem_limit = None
        if est_bytes > 24 * 1024 * 1024:
            # clamp to the chip's physical VMEM minus headroom (64 MiB on v7x)
            vmem_limit = int(min(est_bytes + (8 << 20), _VMEM_CAP - (8 << 20)))
        return pltpu.CompilerParams(dimension_semantics=sem,
                                    vmem_limit_bytes=vmem_limit)

    # --- 1) projection + per-head src/dst attention logits --------------------
    est1 = (2 * tm * (f * 4 + hd2 * 2 + heads * 8)
            + f * hd2 * 4 + 2 * heads * hd2 * 4 + tm * hd2 * 4 + (1 << 20))
    h_bf16, asrc_rows, adst_cols = pl.pallas_call(
        _project_kernel,
        grid=(nt,),
        in_specs=[
            pl.BlockSpec((tm, f), lambda i: (i, 0)),
            pl.BlockSpec((f, hd2), lambda i: (0, 0)),
            pl.BlockSpec((heads, hd2), lambda i: (0, 0)),
            pl.BlockSpec((heads, hd2), lambda i: (0, 0)),
        ],
        out_specs=(
            pl.BlockSpec((tm, hd2), lambda i: (i, 0)),
            pl.BlockSpec((heads, tm), lambda i: (0, i)),
            pl.BlockSpec((tm, heads), lambda i: (i, 0)),
        ),
        out_shape=(
            jax.ShapeDtypeStruct((n_pad, hd2), jnp.bfloat16),
            jax.ShapeDtypeStruct((heads, n_pad), jnp.float32),
            jax.ShapeDtypeStruct((n_pad, heads), jnp.float32),
        ),
        compiler_params=compiler_params(("parallel",), est1),
        cost_estimate=pl.CostEstimate(
            flops=int(2 * n_pad * f * hd2 + 4 * n_pad * hd2 * heads),
            transcendentals=0,
            bytes_accessed=int(4 * n_pad * f + 2 * n_pad * hd2
                               + 8 * n_pad * heads + 4 * f * hd2)),
    )(x_p, w1, asrc_blk, adst_blk)

    # --- 2) GAT attention + aggregation + ReLU + scaled GCN projection --------
    est2 = (2 * tm * ts * 2                       # adj double buffer (bf16)
            + 5 * tm * ts * 4                     # live f32 softmax temporaries
            + 2 * (ts * hd2 * 2 + heads * ts * 4 + tm * heads * 4
                   + tm * 4 + tm * cpad * 2)      # other double-buffered tiles
            + tm * hd2 * 4 + 2 * heads * tm * 4   # online-softmax scratch
            + hd2 * cpad * 4 + (1 << 20))
    z_scaled = pl.pallas_call(
        functools.partial(_gat_gcn_kernel, heads=heads, hidden=hidden_dim,
                          slope=0.2, bf16_exp=bf16_exp),
        grid=(nt, ns),
        in_specs=[
            pl.BlockSpec((tm, ts), lambda i, j: (i, j)),      # adj (bf16)
            pl.BlockSpec((ts, hd2), lambda i, j: (j, 0)),     # h (bf16 src tile)
            pl.BlockSpec((heads, ts), lambda i, j: (0, j)),   # a_src logits
            pl.BlockSpec((tm, heads), lambda i, j: (i, 0)),   # a_dst logits
            pl.BlockSpec((1, hd2), lambda i, j: (0, 0)),      # b1
            pl.BlockSpec((hd2, cpad), lambda i, j: (0, 0)),   # W2 (lane padded)
            pl.BlockSpec((tm, 1), lambda i, j: (i, 0)),       # deg_src^-1/2
        ],
        out_specs=pl.BlockSpec((tm, cpad), lambda i, j: (i, 0)),
        out_shape=jax.ShapeDtypeStruct((n_pad, cpad), jnp.bfloat16),
        scratch_shapes=[
            pltpu.VMEM((heads, tm, 1), jnp.float32),   # running max
            pltpu.VMEM((heads, tm, 1), jnp.float32),   # running denominator
            pltpu.VMEM((tm, hd2), jnp.float32),        # running numerator
        ],
        compiler_params=compiler_params(("parallel", "arbitrary"), est2),
        cost_estimate=pl.CostEstimate(
            flops=int(heads * (2 * n_pad * n_pad * hidden_dim
                               + 10 * n_pad * n_pad) + 2 * n_pad * hd2 * cpad),
            transcendentals=int(heads * n_pad * n_pad),
            bytes_accessed=int(2 * n_pad * n_pad
                               + nt * n_pad * (2 * hd2 + 4 * heads)
                               + 2 * n_pad * cpad)),
    )(adj_p, h_bf16, asrc_rows, adst_cols, b1, w2_pad, dinv_src)

    # --- 3) GCN aggregation + bias + log_softmax ------------------------------
    est3 = (2 * tm * ts * 2 + 2 * ts * cpad * 2 + 2 * tm * cpad * 4
            + tm * cpad * 4 + (1 << 20))
    out_pad = pl.pallas_call(
        _gcn_out_kernel,
        grid=(nt, ns),
        in_specs=[
            pl.BlockSpec((tm, ts), lambda i, j: (i, j)),      # adj (bf16)
            pl.BlockSpec((ts, cpad), lambda i, j: (j, 0)),    # z (bf16 src tile)
            pl.BlockSpec((1, cpad), lambda i, j: (0, 0)),     # b2 (padded -1e9)
            pl.BlockSpec((tm, 1), lambda i, j: (i, 0)),       # deg_dst^-1/2
        ],
        out_specs=pl.BlockSpec((tm, cpad), lambda i, j: (i, 0)),
        out_shape=jax.ShapeDtypeStruct((n_pad, cpad), jnp.float32),
        scratch_shapes=[pltpu.VMEM((tm, cpad), jnp.float32)],
        compiler_params=compiler_params(("parallel", "arbitrary"), est3),
        cost_estimate=pl.CostEstimate(
            flops=int(2 * n_pad * n_pad * cpad + 8 * n_pad * cpad),
            transcendentals=int(n_pad * cpad),
            bytes_accessed=int(2 * n_pad * n_pad + nt * n_pad * cpad * 2
                               + 4 * n_pad * cpad)),
    )(adj_p, z_scaled, b2_pad, dinv_dst)

    return out_pad[:n, :num_classes]


def gat_forward(x, adj, params, *, hidden_dim, num_classes,
                tile_m=None, tile_s=None):
    if tile_m is None:
        # 128 MiB VMEM chips (v5e/v6e) can afford bigger dst tiles than v7x.
        tile_m = 512 if _VMEM_CAP >= (96 << 20) else 256
    if tile_s is None:
        tile_s = 2048
    return _gat_forward_impl(
        x, adj, params, hidden_dim=hidden_dim, num_classes=num_classes,
        tile_m=int(tile_m), tile_s=int(tile_s), bf16_exp=_BF16_EXP_OK)


# --------------------------------------------------------------------------- #
# Pure-JAX reference (mirrors PyG GATConv(2 heads) -> ReLU -> GCNConv -> lsm).
# --------------------------------------------------------------------------- #
def gat_reference(x, adj, params, *, hidden_dim):
    heads = params["att_src"].shape[0]
    h = x @ params["w1"]
    outs = []
    for hh in range(heads):
        hf = h[:, hh * hidden_dim:(hh + 1) * hidden_dim]
        a_src = hf @ params["att_src"][hh]
        a_dst = hf @ params["att_dst"][hh]
        e = a_dst[:, None] + a_src[None, :]
        e = jnp.where(e > 0, e, 0.2 * e)
        e = jnp.where(adj > 0, e, -1e9)
        p = jax.nn.softmax(e, axis=1)
        outs.append(p @ hf)
    h1 = jnp.maximum(jnp.concatenate(outs, axis=-1) + params["b1"], 0.0)
    deg_col = jnp.sum(adj, axis=1, keepdims=True)
    deg_row = jnp.sum(adj, axis=0, keepdims=True)
    norm = adj * lax.rsqrt(deg_col) * lax.rsqrt(deg_row)
    z = norm @ (h1 @ params["w2"]) + params["b2"]
    return jax.nn.log_softmax(z, axis=1)


if __name__ == "__main__":
    NUM_FEATURES, HIDDEN, CLASSES, HEADS = 16, 16, 4, 2

    def make_case(n, key):
        ks = jax.random.split(key, 7)
        x = jax.random.normal(ks[0], (n, NUM_FEATURES), jnp.float32)
        # symmetric ring graph; edge_index layout matches PyG: [2, E] (src; dst)
        src = jnp.arange(n)
        dst = (src + 1) % n
        edge_index = jnp.stack([jnp.concatenate([src, dst]),
                                jnp.concatenate([dst, src])])
        adj = jnp.zeros((n, n), jnp.float32)
        adj = adj.at[edge_index[1], edge_index[0]].set(1.0)    # adj[dst, src]
        adj = adj + jnp.eye(n, dtype=jnp.float32)              # self loops
        params = dict(
            w1=0.1 * jax.random.normal(ks[1], (NUM_FEATURES, HEADS * HIDDEN)),
            att_src=0.1 * jax.random.normal(ks[2], (HEADS, HIDDEN)),
            att_dst=0.1 * jax.random.normal(ks[3], (HEADS, HIDDEN)),
            b1=0.1 * jax.random.normal(ks[4], (1, HEADS * HIDDEN)),
            w2=0.1 * jax.random.normal(ks[5], (HEADS * HIDDEN, CLASSES)),
            b2=0.1 * jax.random.normal(ks[6], (1, CLASSES)),
        )
        return x, adj, params

    key = jax.random.PRNGKey(0)
    k1, k2, k3 = jax.random.split(key, 3)

    cases = [
        (8, dict(), k1),                           # single tile, chip defaults
        (256, dict(tile_m=128, tile_s=128), k2),   # multi dst + src tiles
        (384, dict(tile_m=128, tile_s=256), k3),   # padding + online softmax
    ]
    for n, tiles, kk in cases:
        x, adj, params = make_case(n, kk)
        out = gat_forward(x, adj, params, hidden_dim=HIDDEN,
                          num_classes=CLASSES, **tiles)
        out = jax.block_until_ready(out)
        ref = gat_reference(x, adj, params, hidden_dim=HIDDEN)

        assert out.shape == (n, CLASSES)
        assert bool(jnp.all(jnp.isfinite(out)))
        # rows of a log_softmax output must exponentiate-sum to 1
        assert bool(jnp.allclose(jnp.sum(jnp.exp(out), axis=1), 1.0, atol=1e-4))
        err = float(jnp.max(jnp.abs(out - ref)))
        assert err < 5e-2, f"n={n}: mismatch vs reference: {err}"

    print("KERNEL_OK")
</pallas_src>

<mosaic_0001>
module attributes {stable_mosaic.version = 11 : i64} {
  func.func @_project_kernel(%arg0: i32, %arg1: memref<8x16xf32, #tpu.memory_space<vmem>>, %arg2: memref<16x32xf32, #tpu.memory_space<vmem>>, %arg3: memref<2x32xf32, #tpu.memory_space<vmem>>, %arg4: memref<2x32xf32, #tpu.memory_space<vmem>>, %arg5: memref<8x32xbf16, #tpu.memory_space<vmem>>, %arg6: memref<2x8xf32, #tpu.memory_space<vmem>>, %arg7: memref<8x2xf32, #tpu.memory_space<vmem>>) attributes {dimension_semantics = [#tpu.dimension_semantics<parallel>], iteration_bounds = array<i64: 1>, scalar_prefetch = 0 : i64, scratch_operands = 0 : i64, tpu.core_type = #tpu.core_type<tc>, window_params = [{transform_indices = @transform_0, window_bounds = array<i64: 8, 16>}, {pipeline_mode = #tpu.pipeline_mode<synchronous>, transform_indices = @transform_1, window_bounds = array<i64: 16, 32>}, {pipeline_mode = #tpu.pipeline_mode<synchronous>, transform_indices = @transform_2, window_bounds = array<i64: 2, 32>}, {pipeline_mode = #tpu.pipeline_mode<synchronous>, transform_indices = @transform_3, window_bounds = array<i64: 2, 32>}, {transform_indices = @transform_4, window_bounds = array<i64: 8, 32>}, {transform_indices = @transform_5, window_bounds = array<i64: 2, 8>}, {transform_indices = @transform_6, window_bounds = array<i64: 8, 2>}]} {
    %c0 = arith.constant 0 : index
    %c0_0 = arith.constant 0 : index
    %0 = vector.load %arg1[%c0, %c0_0] : memref<8x16xf32, #tpu.memory_space<vmem>>, vector<8x16xf32>
    %c0_1 = arith.constant 0 : index
    %c0_2 = arith.constant 0 : index
    %1 = vector.load %arg2[%c0_1, %c0_2] : memref<16x32xf32, #tpu.memory_space<vmem>>, vector<16x32xf32>
    %cst = arith.constant dense<0.000000e+00> : vector<8x32xf32>
    %2 = tpu.matmul %0, %1, %cst {dimension_numbers = #tpu.dot_dimension_numbers<[1], [0], [0], [1], [0, 0, 1, 1], [], []>} : vector<8x16xf32>, vector<16x32xf32>, vector<8x32xf32> -> vector<8x32xf32>
    %3 = arith.truncf %2 : vector<8x32xf32> to vector<8x32xbf16>
    %c0_3 = arith.constant 0 : index
    %c0_4 = arith.constant 0 : index
    %4 = vector.load %arg5[%c0_3, %c0_4] : memref<8x32xbf16, #tpu.memory_space<vmem>>, vector<8x32xbf16>
    tpu.vector_store %arg5[%c0_3, %c0_4], %3 {strides = array<i32>} : memref<8x32xbf16, #tpu.memory_space<vmem>>, vector<8x32xbf16>,
    %c0_5 = arith.constant 0 : index
    %c0_6 = arith.constant 0 : index
    %5 = vector.load %arg3[%c0_5, %c0_6] : memref<2x32xf32, #tpu.memory_space<vmem>>, vector<2x32xf32>
    %cst_7 = arith.constant dense<0.000000e+00> : vector<2x8xf32>
    %6 = tpu.matmul %5, %2, %cst_7 {dimension_numbers = #tpu.dot_dimension_numbers<[1], [1], [0], [0], [0, 0, 1, 0], [], []>} : vector<2x32xf32>, vector<8x32xf32>, vector<2x8xf32> -> vector<2x8xf32>
    %c0_8 = arith.constant 0 : index
    %c0_9 = arith.constant 0 : index
    %7 = vector.load %arg6[%c0_8, %c0_9] : memref<2x8xf32, #tpu.memory_space<vmem>>, vector<2x8xf32>
    tpu.vector_store %arg6[%c0_8, %c0_9], %6 {strides = array<i32>} : memref<2x8xf32, #tpu.memory_space<vmem>>, vector<2x8xf32>,
    %c0_10 = arith.constant 0 : index
    %c0_11 = arith.constant 0 : index
    %8 = vector.load %arg4[%c0_10, %c0_11] : memref<2x32xf32, #tpu.memory_space<vmem>>, vector<2x32xf32>
    %cst_12 = arith.constant dense<0.000000e+00> : vector<8x2xf32>
    %9 = tpu.matmul %2, %8, %cst_12 {dimension_numbers = #tpu.dot_dimension_numbers<[1], [1], [0], [0], [0, 0, 1, 0], [], []>} : vector<8x32xf32>, vector<2x32xf32>, vector<8x2xf32> -> vector<8x2xf32>
    %c0_13 = arith.constant 0 : index
    %c0_14 = arith.constant 0 : index
    %10 = vector.load %arg7[%c0_13, %c0_14] : memref<8x2xf32, #tpu.memory_space<vmem>>, vector<8x2xf32>
    tpu.vector_store %arg7[%c0_13, %c0_14], %9 {strides = array<i32>} : memref<8x2xf32, #tpu.memory_space<vmem>>, vector<8x2xf32>,
    return
  }
  func.func @transform_0(%arg0: i32) -> (i32, i32) {
    %c0_i32 = arith.constant 0 : i32
    %c0_i32_0 = arith.constant 0 : i32
    return %arg0, %c0_i32 : i32, i32
  }
  func.func @transform_1(%arg0: i32) -> (i32, i32) {
    %c0_i32 = arith.constant 0 : i32
    %c0_i32_0 = arith.constant 0 : i32
    %c0_i32_1 = arith.constant 0 : i32
    return %c0_i32, %c0_i32_0 : i32, i32
  }
  func.func @transform_2(%arg0: i32) -> (i32, i32) {
    %c0_i32 = arith.constant 0 : i32
    %c0_i32_0 = arith.constant 0 : i32
    %c0_i32_1 = arith.constant 0 : i32
    return %c0_i32, %c0_i32_0 : i32, i32
  }
  func.func @transform_3(%arg0: i32) -> (i32, i32) {
    %c0_i32 = arith.constant 0 : i32
    %c0_i32_0 = arith.constant 0 : i32
    %c0_i32_1 = arith.constant 0 : i32
    return %c0_i32, %c0_i32_0 : i32, i32
  }
  func.func @transform_4(%arg0: i32) -> (i32, i32) {
    %c0_i32 = arith.constant 0 : i32
    %c0_i32_0 = arith.constant 0 : i32
    return %arg0, %c0_i32 : i32, i32
  }
  func.func @transform_5(%arg0: i32) -> (i32, i32) {
    %c0_i32 = arith.constant 0 : i32
    %c0_i32_0 = arith.constant 0 : i32
    return %c0_i32, %arg0 : i32, i32
  }
  func.func @transform_6(%arg0: i32) -> (i32, i32) {
    %c0_i32 = arith.constant 0 : i32
    %c0_i32_0 = arith.constant 0 : i32
    return %arg0, %c0_i32 : i32, i32
  }
}

module attributes {stable_mosaic.version = 11 : i64} {
  func.func @_gat_gcn_kernel(%arg0: i32, %arg1: i32, %arg2: memref<8x8xbf16, #tpu.memory_space<vmem>>, %arg3: memref<8x32xbf16, #tpu.memory_space<vmem>>, %arg4: memref<2x8xf32, #tpu.memory_space<vmem>>, %arg5: memref<8x2xf32, #tpu.memory_space<vmem>>, %arg6: memref<1x32xf32, #tpu.memory_space<vmem>>, %arg7: memref<32x128xf32, #tpu.memory_space<vmem>>, %arg8: memref<8x1xf32, #tpu.memory_space<vmem>>, %arg9: memref<8x128xbf16, #tpu.memory_space<vmem>>, %arg10: memref<2x8x1xf32, #tpu.memory_space<vmem>>, %arg11: memref<2x8x1xf32, #tpu.memory_space<vmem>>, %arg12: memref<8x32xf32, #tpu.memory_space<vmem>>) attributes {dimension_semantics = [#tpu.dimension_semantics<parallel>, #tpu.dimension_semantics<arbitrary>], iteration_bounds = array<i64: 1, 1>, scalar_prefetch = 0 : i64, scratch_operands = 3 : i64, tpu.core_type = #tpu.core_type<tc>, window_params = [{transform_indices = @transform_0, window_bounds = array<i64: 8, 8>}, {transform_indices = @transform_1, window_bounds = array<i64: 8, 32>}, {transform_indices = @transform_2, window_bounds = array<i64: 2, 8>}, {transform_indices = @transform_3, window_bounds = array<i64: 8, 2>}, {pipeline_mode = #tpu.pipeline_mode<synchronous>, transform_indices = @transform_4, window_bounds = array<i64: 1, 32>}, {pipeline_mode = #tpu.pipeline_mode<synchronous>, transform_indices = @transform_5, window_bounds = array<i64: 32, 128>}, {transform_indices = @transform_6, window_bounds = array<i64: 8, 1>}, {transform_indices = @transform_7, window_bounds = array<i64: 8, 128>}]} {
    %c0_i32 = arith.constant 0 : i32
    %0 = arith.cmpi eq, %arg1, %c0_i32 : i32
    %1 = arith.extui %0 : i1 to i32
    %c0_i32_0 = arith.constant 0 : i32
    %2 = arith.cmpi ne, %1, %c0_i32_0 : i32
    scf.if %2 {
      %cst_51 = arith.constant 0xFF800000 : f32
      %88 = vector.broadcast %cst_51 : f32 to vector<2x8x1xf32>
      %c0_52 = arith.constant 0 : index
      %c0_53 = arith.constant 0 : index
      %c0_54 = arith.constant 0 : index
      %89 = vector.load %arg10[%c0_52, %c0_53, %c0_54] : memref<2x8x1xf32, #tpu.memory_space<vmem>>, vector<2x8x1xf32>
      tpu.vector_store %arg10[%c0_52, %c0_53, %c0_54], %88 {strides = array<i32>} : memref<2x8x1xf32, #tpu.memory_space<vmem>>, vector<2x8x1xf32>,
      %cst_55 = arith.constant 0.000000e+00 : f32
      %90 = vector.broadcast %cst_55 : f32 to vector<2x8x1xf32>
      %c0_56 = arith.constant 0 : index
      %c0_57 = arith.constant 0 : index
      %c0_58 = arith.constant 0 : index
      %91 = vector.load %arg11[%c0_56, %c0_57, %c0_58] : memref<2x8x1xf32, #tpu.memory_space<vmem>>, vector<2x8x1xf32>
      tpu.vector_store %arg11[%c0_56, %c0_57, %c0_58], %90 {strides = array<i32>} : memref<2x8x1xf32, #tpu.memory_space<vmem>>, vector<2x8x1xf32>,
      %cst_59 = arith.constant 0.000000e+00 : f32
      %92 = vector.broadcast %cst_59 : f32 to vector<8x32xf32>
      %c0_60 = arith.constant 0 : index
      %c0_61 = arith.constant 0 : index
      %93 = vector.load %arg12[%c0_60, %c0_61] : memref<8x32xf32, #tpu.memory_space<vmem>>, vector<8x32xf32>
      tpu.vector_store %arg12[%c0_60, %c0_61], %92 {strides = array<i32>} : memref<8x32xf32, #tpu.memory_space<vmem>>, vector<8x32xf32>,
    } else {
    }
    %c0 = arith.constant 0 : index
    %c0_1 = arith.constant 0 : index
    %3 = vector.load %arg2[%c0, %c0_1] : memref<8x8xbf16, #tpu.memory_space<vmem>>, vector<8x8xbf16>
    %c0_2 = arith.constant 0 : index
    %c0_3 = arith.constant 0 : index
    %4 = vector.load %arg3[%c0_2, %c0_3] : memref<8x32xbf16, #tpu.memory_space<vmem>>, vector<8x32xbf16>
    %c0_4 = arith.constant 0 : index
    %c0_5 = arith.constant 0 : index
    %5 = vector.load %arg5[%c0_4, %c0_5] : memref<8x2xf32, #tpu.memory_space<vmem>>, vector<8x1xf32>
    %c0_6 = arith.constant 0 : index
    %c0_7 = arith.constant 0 : index
    %6 = vector.load %arg4[%c0_6, %c0_7] : memref<2x8xf32, #tpu.memory_space<vmem>>, vector<1x8xf32>
    %7 = vector.broadcast %5 : vector<8x1xf32> to vector<8x8xf32>
    %8 = vector.broadcast %6 : vector<1x8xf32> to vector<8x8xf32>
    %9 = arith.addf %7, %8 : vector<8x8xf32>
    %cst = arith.constant 2.000000e-01 : f32
    %10 = vector.broadcast %cst : f32 to vector<8x8xf32>
    %11 = arith.mulf %10, %9 : vector<8x8xf32>
    %12 = arith.maximumf %9, %11 : vector<8x8xf32>
    %c0_8 = arith.constant 0 : index
    %c0_9 = arith.constant 0 : index
    %c0_10 = arith.constant 0 : index
    %13 = vector.load %arg10[%c0_8, %c0_9, %c0_10] : memref<2x8x1xf32, #tpu.memory_space<vmem>>, vector<1x8x1xf32>
    %14 = vector.shape_cast %13 : vector<1x8x1xf32> to vector<8x1xf32>
    %cst_11 = arith.constant dense<0xFF800000> : vector<8xf32>
    %15 = vector.multi_reduction <maximumf>, %12, %cst_11 [1] : vector<8x8xf32> to vector<8xf32>
    %16 = vector.shape_cast %15 : vector<8xf32> to vector<8x1xf32>
    %17 = arith.maximumf %14, %16 : vector<8x1xf32>
    %18 = arith.subf %14, %17 : vector<8x1xf32>
    %19 = math.exp %18 : vector<8x1xf32>
    %20 = vector.broadcast %17 : vector<8x1xf32> to vector<8x8xf32>
    %21 = arith.subf %12, %20 : vector<8x8xf32>
    %22 = arith.truncf %21 : vector<8x8xf32> to vector<8x8xbf16>
    %23 = math.exp %22 : vector<8x8xbf16>
    %24 = arith.mulf %3, %23 : vector<8x8xbf16>
    %25 = arith.extf %24 : vector<8x8xbf16> to vector<8x8xf32>
    %cst_12 = arith.constant dense<0.000000e+00> : vector<8xf32>
    %26 = vector.multi_reduction <add>, %25, %cst_12 [1] : vector<8x8xf32> to vector<8xf32>
    %27 = vector.shape_cast %26 : vector<8xf32> to vector<8x1xf32>
    %c0_13 = arith.constant 0 : index
    %c0_14 = arith.constant 0 : index
    %c0_15 = arith.constant 0 : index
    %28 = vector.load %arg11[%c0_13, %c0_14, %c0_15] : memref<2x8x1xf32, #tpu.memory_space<vmem>>, vector<1x8x1xf32>
    %29 = vector.shape_cast %28 : vector<1x8x1xf32> to vector<8x1xf32>
    %30 = arith.mulf %19, %29 : vector<8x1xf32>
    %31 = arith.addf %30, %27 : vector<8x1xf32>
    %c0_16 = arith.constant 0 : index
    %c0_17 = arith.constant 0 : index
    %c0_18 = arith.constant 0 : index
    %32 = vector.load %arg11[%c0_16, %c0_17, %c0_18] : memref<2x8x1xf32, #tpu.memory_space<vmem>>, vector<1x8x1xf32>
    %33 = vector.shape_cast %32 : vector<1x8x1xf32> to vector<8x1xf32>
    %34 = vector.shape_cast %31 : vector<8x1xf32> to vector<1x8x1xf32>
    tpu.vector_store %arg11[%c0_16, %c0_17, %c0_18], %34 {strides = array<i32>} : memref<2x8x1xf32, #tpu.memory_space<vmem>>, vector<1x8x1xf32>,
    %c0_19 = arith.constant 0 : index
    %c0_20 = arith.constant 0 : index
    %c0_21 = arith.constant 0 : index
    %35 = vector.load %arg10[%c0_19, %c0_20, %c0_21] : memref<2x8x1xf32, #tpu.memory_space<vmem>>, vector<1x8x1xf32>
    %36 = vector.shape_cast %35 : vector<1x8x1xf32> to vector<8x1xf32>
    %37 = vector.shape_cast %17 : vector<8x1xf32> to vector<1x8x1xf32>
    tpu.vector_store %arg10[%c0_19, %c0_20, %c0_21], %37 {strides = array<i32>} : memref<2x8x1xf32, #tpu.memory_space<vmem>>, vector<1x8x1xf32>,
    %38 = vector.extract_strided_slice %4 {offsets = [0, 0], sizes = [8, 16], strides = [1, 1]} : vector<8x32xbf16> to vector<8x16xbf16>
    %cst_22 = arith.constant dense<0.000000e+00> : vector<8x16xf32>
    %39 = tpu.matmul %24, %38, %cst_22 {dimension_numbers = #tpu.dot_dimension_numbers<[1], [0], [0], [1], [0, 0, 1, 1], [], []>} : vector<8x8xbf16>, vector<8x16xbf16>, vector<8x16xf32> -> vector<8x16xf32>
    %c0_23 = arith.constant 0 : index
    %c0_24 = arith.constant 0 : index
    %40 = vector.load %arg12[%c0_23, %c0_24] : memref<8x32xf32, #tpu.memory_space<vmem>>, vector<8x16xf32>
    %41 = vector.broadcast %19 : vector<8x1xf32> to vector<8x16xf32>
    %42 = arith.mulf %41, %40 : vector<8x16xf32>
    %43 = arith.addf %42, %39 : vector<8x16xf32>
    %c0_25 = arith.constant 0 : index
    %c0_26 = arith.constant 0 : index
    %44 = vector.load %arg12[%c0_25, %c0_26] : memref<8x32xf32, #tpu.memory_space<vmem>>, vector<8x16xf32>
    tpu.vector_store %arg12[%c0_25, %c0_26], %43 {strides = array<i32>} : memref<8x32xf32, #tpu.memory_space<vmem>>, vector<8x16xf32>,
    %c0_27 = arith.constant 0 : index
    %c1 = arith.constant 1 : index
    %45 = vector.load %arg5[%c0_27, %c1] : memref<8x2xf32, #tpu.memory_space<vmem>>, vector<8x1xf32>
    %c1_28 = arith.constant 1 : index
    %c0_29 = arith.constant 0 : index
    %46 = vector.load %arg4[%c1_28, %c0_29] : memref<2x8xf32, #tpu.memory_space<vmem>>, vector<1x8xf32>
    %47 = vector.broadcast %45 : vector<8x1xf32> to vector<8x8xf32>
    %48 = vector.broadcast %46 : vector<1x8xf32> to vector<8x8xf32>
    %49 = arith.addf %47, %48 : vector<8x8xf32>
    %cst_30 = arith.constant 2.000000e-01 : f32
    %50 = vector.broadcast %cst_30 : f32 to vector<8x8xf32>
    %51 = arith.mulf %50, %49 : vector<8x8xf32>
    %52 = arith.maximumf %49, %51 : vector<8x8xf32>
    %c1_31 = arith.constant 1 : index
    %c0_32 = arith.constant 0 : index
    %c0_33 = arith.constant 0 : index
    %53 = vector.load %arg10[%c1_31, %c0_32, %c0_33] : memref<2x8x1xf32, #tpu.memory_space<vmem>>, vector<1x8x1xf32>
    %54 = vector.shape_cast %53 : vector<1x8x1xf32> to vector<8x1xf32>
    %cst_34 = arith.constant dense<0xFF800000> : vector<8xf32>
    %55 = vector.multi_reduction <maximumf>, %52, %cst_34 [1] : vector<8x8xf32> to vector<8xf32>
    %56 = vector.shape_cast %55 : vector<8xf32> to vector<8x1xf32>
    %57 = arith.maximumf %54, %56 : vector<8x1xf32>
    %58 = arith.subf %54, %57 : vector<8x1xf32>
    %59 = math.exp %58 : vector<8x1xf32>
    %60 = vector.broadcast %57 : vector<8x1xf32> to vector<8x8xf32>
    %61 = arith.subf %52, %60 : vector<8x8xf32>
    %62 = arith.truncf %61 : vector<8x8xf32> to vector<8x8xbf16>
    %63 = math.exp %62 : vector<8x8xbf16>
    %64 = arith.mulf %3, %63 : vector<8x8xbf16>
    %65 = arith.extf %64 : vector<8x8xbf16> to vector<8x8xf32>
    %cst_35 = arith.constant dense<0.000000e+00> : vector<8xf32>
    %66 = vector.multi_reduction <add>, %65, %cst_35 [1] : vector<8x8xf32> to vector<8xf32>
    %67 = vector.shape_cast %66 : vector<8xf32> to vector<8x1xf32>
    %c1_36 = arith.constant 1 : index
    %c0_37 = arith.constant 0 : index
    %c0_38 = arith.constant 0 : index
    %68 = vector.load %arg11[%c1_36, %c0_37, %c0_38] : memref<2x8x1xf32, #tpu.memory_space<vmem>>, vector<1x8x1xf32>
    %69 = vector.shape_cast %68 : vector<1x8x1xf32> to vector<8x1xf32>
    %70 = arith.mulf %59, %69 : vector<8x1xf32>
    %71 = arith.addf %70, %67 : vector<8x1xf32>
    %c1_39 = arith.constant 1 : index
    %c0_40 = arith.constant 0 : index
    %c0_41 = arith.constant 0 : index
    %72 = vector.load %arg11[%c1_39, %c0_40, %c0_41] : memref<2x8x1xf32, #tpu.memory_space<vmem>>, vector<1x8x1xf32>
    %73 = vector.shape_cast %72 : vector<1x8x1xf32> to vector<8x1xf32>
    %74 = vector.shape_cast %71 : vector<8x1xf32> to vector<1x8x1xf32>
    tpu.vector_store %arg11[%c1_39, %c0_40, %c0_41], %74 {strides = array<i32>} : memref<2x8x1xf32, #tpu.memory_space<vmem>>, vector<1x8x1xf32>,
    %c1_42 = arith.constant 1 : index
    %c0_43 = arith.constant 0 : index
    %c0_44 = arith.constant 0 : index
    %75 = vector.load %arg10[%c1_42, %c0_43, %c0_44] : memref<2x8x1xf32, #tpu.memory_space<vmem>>, vector<1x8x1xf32>
    %76 = vector.shape_cast %75 : vector<1x8x1xf32> to vector<8x1xf32>
    %77 = vector.shape_cast %57 : vector<8x1xf32> to vector<1x8x1xf32>
    tpu.vector_store %arg10[%c1_42, %c0_43, %c0_44], %77 {strides = array<i32>} : memref<2x8x1xf32, #tpu.memory_space<vmem>>, vector<1x8x1xf32>,
    %78 = vector.extract_strided_slice %4 {offsets = [0, 16], sizes = [8, 16], strides = [1, 1]} : vector<8x32xbf16> to vector<8x16xbf16>
    %cst_45 = arith.constant dense<0.000000e+00> : vector<8x16xf32>
    %79 = tpu.matmul %64, %78, %cst_45 {dimension_numbers = #tpu.dot_dimension_numbers<[1], [0], [0], [1], [0, 0, 1, 1], [], []>} : vector<8x8xbf16>, vector<8x16xbf16>, vector<8x16xf32> -> vector<8x16xf32>
    %c0_46 = arith.constant 0 : index
    %c16 = arith.constant 16 : index
    %80 = vector.load %arg12[%c0_46, %c16] : memref<8x32xf32, #tpu.memory_space<vmem>>, vector<8x16xf32>
    %81 = vector.broadcast %59 : vector<8x1xf32> to vector<8x16xf32>
    %82 = arith.mulf %81, %80 : vector<8x16xf32>
    %83 = arith.addf %82, %79 : vector<8x16xf32>
    %c0_47 = arith.constant 0 : index
    %c16_48 = arith.constant 16 : index
    %84 = vector.load %arg12[%c0_47, %c16_48] : memref<8x32xf32, #tpu.memory_space<vmem>>, vector<8x16xf32>
    tpu.vector_store %arg12[%c0_47, %c16_48], %83 {strides = array<i32>} : memref<8x32xf32, #tpu.memory_space<vmem>>, vector<8x16xf32>,
    %c0_i32_49 = arith.constant 0 : i32
    %85 = arith.cmpi eq, %arg1, %c0_i32_49 : i32
    %86 = arith.extui %85 : i1 to i32
    %c0_i32_50 = arith.constant 0 : i32
    %87 = arith.cmpi ne, %86, %c0_i32_50 : i32
    scf.if %87 {
      %c0_51 = arith.constant 0 : index
      %c0_52 = arith.constant 0 : index
      %c0_53 = arith.constant 0 : index
      %88 = vector.load %arg11[%c0_51, %c0_52, %c0_53] : memref<2x8x1xf32, #tpu.memory_space<vmem>>, vector<1x8x1xf32>
      %89 = vector.shape_cast %88 : vector<1x8x1xf32> to vector<8x1xf32>
      %cst_54 = arith.constant 9.99999968E-21 : f32
      %90 = vector.broadcast %cst_54 : f32 to vector<8x1xf32>
      %91 = arith.maximumf %89, %90 : vector<8x1xf32>
      %92 = tpu.reciprocal %91 {approx = true} : vector<8x1xf32> -> vector<8x1xf32>
      %c0_55 = arith.constant 0 : index
      %c0_56 = arith.constant 0 : index
      %93 = vector.load %arg12[%c0_55, %c0_56] : memref<8x32xf32, #tpu.memory_space<vmem>>, vector<8x16xf32>
      %94 = vector.broadcast %92 : vector<8x1xf32> to vector<8x16xf32>
      %95 = arith.mulf %93, %94 : vector<8x16xf32>
      %c0_57 = arith.constant 0 : index
      %c0_58 = arith.constant 0 : index
      %96 = vector.load %arg12[%c0_57, %c0_58] : memref<8x32xf32, #tpu.memory_space<vmem>>, vector<8x16xf32>
      tpu.vector_store %arg12[%c0_57, %c0_58], %95 {strides = array<i32>} : memref<8x32xf32, #tpu.memory_space<vmem>>, vector<8x16xf32>,
      %c1_59 = arith.constant 1 : index
      %c0_60 = arith.constant 0 : index
      %c0_61 = arith.constant 0 : index
      %97 = vector.load %arg11[%c1_59, %c0_60, %c0_61] : memref<2x8x1xf32, #tpu.memory_space<vmem>>, vector<1x8x1xf32>
      %98 = vector.shape_cast %97 : vector<1x8x1xf32> to vector<8x1xf32>
      %cst_62 = arith.constant 9.99999968E-21 : f32
      %99 = vector.broadcast %cst_62 : f32 to vector<8x1xf32>
      %100 = arith.maximumf %98, %99 : vector<8x1xf32>
      %101 = tpu.reciprocal %100 {approx = true} : vector<8x1xf32> -> vector<8x1xf32>
      %c0_63 = arith.constant 0 : index
      %c16_64 = arith.constant 16 : index
      %102 = vector.load %arg12[%c0_63, %c16_64] : memref<8x32xf32, #tpu.memory_space<vmem>>, vector<8x16xf32>
      %103 = vector.broadcast %101 : vector<8x1xf32> to vector<8x16xf32>
      %104 = arith.mulf %102, %103 : vector<8x16xf32>
      %c0_65 = arith.constant 0 : index
      %c16_66 = arith.constant 16 : index
      %105 = vector.load %arg12[%c0_65, %c16_66] : memref<8x32xf32, #tpu.memory_space<vmem>>, vector<8x16xf32>
      tpu.vector_store %arg12[%c0_65, %c16_66], %104 {strides = array<i32>} : memref<8x32xf32, #tpu.memory_space<vmem>>, vector<8x16xf32>,
      %c0_67 = arith.constant 0 : index
      %c0_68 = arith.constant 0 : index
      %106 = vector.load %arg12[%c0_67, %c0_68] : memref<8x32xf32, #tpu.memory_space<vmem>>, vector<8x32xf32>
      %c0_69 = arith.constant 0 : index
      %c0_70 = arith.constant 0 : index
      %107 = vector.load %arg6[%c0_69, %c0_70] : memref<1x32xf32, #tpu.memory_space<vmem>>, vector<1x32xf32>
      %108 = vector.broadcast %107 : vector<1x32xf32> to vector<8x32xf32>
      %109 = arith.addf %106, %108 : vector<8x32xf32>
      %cst_71 = arith.constant 0.000000e+00 : f32
      %110 = vector.broadcast %cst_71 : f32 to vector<8x32xf32>
      %111 = arith.maximumf %109, %110 : vector<8x32xf32>
      %c0_72 = arith.constant 0 : index
      %c0_73 = arith.constant 0 : index
      %112 = vector.load %arg7[%c0_72, %c0_73] : memref<32x128xf32, #tpu.memory_space<vmem>>, vector<32x128xf32>
      %cst_74 = arith.constant dense<0.000000e+00> : vector<8x128xf32>
      %113 = tpu.matmul %111, %112, %cst_74 {dimension_numbers = #tpu.dot_dimension_numbers<[1], [0], [0], [1], [0, 0, 1, 1], [], []>} : vector<8x32xf32>, vector<32x128xf32>, vector<8x128xf32> -> vector<8x128xf32>
      %c0_75 = arith.constant 0 : index
      %c0_76 = arith.constant 0 : index
      %114 = vector.load %arg8[%c0_75, %c0_76] : memref<8x1xf32, #tpu.memory_space<vmem>>, vector<8x1xf32>
      %115 = vector.broadcast %114 : vector<8x1xf32> to vector<8x128xf32>
      %116 = arith.mulf %113, %115 : vector<8x128xf32>
      %117 = arith.truncf %116 : vector<8x128xf32> to vector<8x128xbf16>
      %c0_77 = arith.constant 0 : index
      %c0_78 = arith.constant 0 : index
      %118 = vector.load %arg9[%c0_77, %c0_78] : memref<8x128xbf16, #tpu.memory_space<vmem>>, vector<8x128xbf16>
      tpu.vector_store %arg9[%c0_77, %c0_78], %117 {strides = array<i32>} : memref<8x128xbf16, #tpu.memory_space<vmem>>, vector<8x128xbf16>,
    } else {
    }
    return
  }
  func.func @transform_0(%arg0: i32, %arg1: i32) -> (i32, i32) {
    %c0_i32 = arith.constant 0 : i32
    return %arg0, %arg1 : i32, i32
  }
  func.func @transform_1(%arg0: i32, %arg1: i32) -> (i32, i32) {
    %c0_i32 = arith.constant 0 : i32
    %c0_i32_0 = arith.constant 0 : i32
    return %arg1, %c0_i32 : i32, i32
  }
  func.func @transform_2(%arg0: i32, %arg1: i32) -> (i32, i32) {
    %c0_i32 = arith.constant 0 : i32
    %c0_i32_0 = arith.constant 0 : i32
    return %c0_i32, %arg1 : i32, i32
  }
  func.func @transform_3(%arg0: i32, %arg1: i32) -> (i32, i32) {
    %c0_i32 = arith.constant 0 : i32
    %c0_i32_0 = arith.constant 0 : i32
    return %arg0, %c0_i32 : i32, i32
  }
  func.func @transform_4(%arg0: i32, %arg1: i32) -> (i32, i32) {
    %c0_i32 = arith.constant 0 : i32
    %c0_i32_0 = arith.constant 0 : i32
    %c0_i32_1 = arith.constant 0 : i32
    return %c0_i32, %c0_i32_0 : i32, i32
  }
  func.func @transform_5(%arg0: i32, %arg1: i32) -> (i32, i32) {
    %c0_i32 = arith.constant 0 : i32
    %c0_i32_0 = arith.constant 0 : i32
    %c0_i32_1 = arith.constant 0 : i32
    return %c0_i32, %c0_i32_0 : i32, i32
  }
  func.func @transform_6(%arg0: i32, %arg1: i32) -> (i32, i32) {
    %c0_i32 = arith.constant 0 : i32
    %c0_i32_0 = arith.constant 0 : i32
    return %arg0, %c0_i32 : i32, i32
  }
  func.func @transform_7(%arg0: i32, %arg1: i32) -> (i32, i32) {
    %c0_i32 = arith.constant 0 : i32
    %c0_i32_0 = arith.constant 0 : i32
    return %arg0, %c0_i32 : i32, i32
  }
}

module attributes {stable_mosaic.version = 11 : i64} {
  func.func @_gcn_out_kernel(%arg0: i32, %arg1: i32, %arg2: memref<8x8xbf16, #tpu.memory_space<vmem>>, %arg3: memref<8x128xbf16, #tpu.memory_space<vmem>>, %arg4: memref<1x128xf32, #tpu.memory_space<vmem>>, %arg5: memref<8x1xf32, #tpu.memory_space<vmem>>, %arg6: memref<8x128xf32, #tpu.memory_space<vmem>>, %arg7: memref<8x128xf32, #tpu.memory_space<vmem>>) attributes {dimension_semantics = [#tpu.dimension_semantics<parallel>, #tpu.dimension_semantics<arbitrary>], iteration_bounds = array<i64: 1, 1>, scalar_prefetch = 0 : i64, scratch_operands = 1 : i64, tpu.core_type = #tpu.core_type<tc>, window_params = [{transform_indices = @transform_0, window_bounds = array<i64: 8, 8>}, {transform_indices = @transform_1, window_bounds = array<i64: 8, 128>}, {pipeline_mode = #tpu.pipeline_mode<synchronous>, transform_indices = @transform_2, window_bounds = array<i64: 1, 128>}, {transform_indices = @transform_3, window_bounds = array<i64: 8, 1>}, {transform_indices = @transform_4, window_bounds = array<i64: 8, 128>}]} {
    %c0_i32 = arith.constant 0 : i32
    %0 = arith.cmpi eq, %arg1, %c0_i32 : i32
    %1 = arith.extui %0 : i1 to i32
    %c0_i32_0 = arith.constant 0 : i32
    %2 = arith.cmpi ne, %1, %c0_i32_0 : i32
    scf.if %2 {
      %cst_10 = arith.constant 0.000000e+00 : f32
      %12 = vector.broadcast %cst_10 : f32 to vector<8x128xf32>
      %c0_11 = arith.constant 0 : index
      %c0_12 = arith.constant 0 : index
      %13 = vector.load %arg7[%c0_11, %c0_12] : memref<8x128xf32, #tpu.memory_space<vmem>>, vector<8x128xf32>
      tpu.vector_store %arg7[%c0_11, %c0_12], %12 {strides = array<i32>} : memref<8x128xf32, #tpu.memory_space<vmem>>, vector<8x128xf32>,
    } else {
    }
    %c0 = arith.constant 0 : index
    %c0_1 = arith.constant 0 : index
    %3 = vector.load %arg7[%c0, %c0_1] : memref<8x128xf32, #tpu.memory_space<vmem>>, vector<8x128xf32>
    %c0_2 = arith.constant 0 : index
    %c0_3 = arith.constant 0 : index
    %4 = vector.load %arg2[%c0_2, %c0_3] : memref<8x8xbf16, #tpu.memory_space<vmem>>, vector<8x8xbf16>
    %c0_4 = arith.constant 0 : index
    %c0_5 = arith.constant 0 : index
    %5 = vector.load %arg3[%c0_4, %c0_5] : memref<8x128xbf16, #tpu.memory_space<vmem>>, vector<8x128xbf16>
    %cst = arith.constant dense<0.000000e+00> : vector<8x128xf32>
    %6 = tpu.matmul %4, %5, %cst {dimension_numbers = #tpu.dot_dimension_numbers<[1], [0], [0], [1], [0, 0, 1, 1], [], []>} : vector<8x8xbf16>, vector<8x128xbf16>, vector<8x128xf32> -> vector<8x128xf32>
    %7 = arith.addf %3, %6 : vector<8x128xf32>
    %c0_6 = arith.constant 0 : index
    %c0_7 = arith.constant 0 : index
    %8 = vector.load %arg7[%c0_6, %c0_7] : memref<8x128xf32, #tpu.memory_space<vmem>>, vector<8x128xf32>
    tpu.vector_store %arg7[%c0_6, %c0_7], %7 {strides = array<i32>} : memref<8x128xf32, #tpu.memory_space<vmem>>, vector<8x128xf32>,
    %c0_i32_8 = arith.constant 0 : i32
    %9 = arith.cmpi eq, %arg1, %c0_i32_8 : i32
    %10 = arith.extui %9 : i1 to i32
    %c0_i32_9 = arith.constant 0 : i32
    %11 = arith.cmpi ne, %10, %c0_i32_9 : i32
    scf.if %11 {
      %c0_10 = arith.constant 0 : index
      %c0_11 = arith.constant 0 : index
      %12 = vector.load %arg5[%c0_10, %c0_11] : memref<8x1xf32, #tpu.memory_space<vmem>>, vector<8x1xf32>
      %c0_12 = arith.constant 0 : index
      %c0_13 = arith.constant 0 : index
      %13 = vector.load %arg7[%c0_12, %c0_13] : memref<8x128xf32, #tpu.memory_space<vmem>>, vector<8x128xf32>
      %14 = vector.broadcast %12 : vector<8x1xf32> to vector<8x128xf32>
      %15 = arith.mulf %14, %13 : vector<8x128xf32>
      %c0_14 = arith.constant 0 : index
      %c0_15 = arith.constant 0 : index
      %16 = vector.load %arg4[%c0_14, %c0_15] : memref<1x128xf32, #tpu.memory_space<vmem>>, vector<1x128xf32>
      %17 = vector.broadcast %16 : vector<1x128xf32> to vector<8x128xf32>
      %18 = arith.addf %15, %17 : vector<8x128xf32>
      %cst_16 = arith.constant dense<0xFF800000> : vector<8xf32>
      %19 = vector.multi_reduction <maximumf>, %18, %cst_16 [1] : vector<8x128xf32> to vector<8xf32>
      %20 = vector.shape_cast %19 : vector<8xf32> to vector<8x1xf32>
      %21 = vector.broadcast %20 : vector<8x1xf32> to vector<8x128xf32>
      %22 = arith.subf %18, %21 : vector<8x128xf32>
      %23 = math.exp %22 : vector<8x128xf32>
      %cst_17 = arith.constant dense<0.000000e+00> : vector<8xf32>
      %24 = vector.multi_reduction <add>, %23, %cst_17 [1] : vector<8x128xf32> to vector<8xf32>
      %25 = vector.shape_cast %24 : vector<8xf32> to vector<8x1xf32>
      %26 = math.log %25 : vector<8x1xf32>
      %27 = vector.broadcast %26 : vector<8x1xf32> to vector<8x128xf32>
      %28 = arith.subf %22, %27 : vector<8x128xf32>
      %c0_18 = arith.constant 0 : index
      %c0_19 = arith.constant 0 : index
      %29 = vector.load %arg6[%c0_18, %c0_19] : memref<8x128xf32, #tpu.memory_space<vmem>>, vector<8x128xf32>
      tpu.vector_store %arg6[%c0_18, %c0_19], %28 {strides = array<i32>} : memref<8x128xf32, #tpu.memory_space<vmem>>, vector<8x128xf32>,
    } else {
    }
    return
  }
  func.func @transform_0(%arg0: i32, %arg1: i32) -> (i32, i32) {
    %c0_i32 = arith.constant 0 : i32
    return %arg0, %arg1 : i32, i32
  }
  func.func @transform_1(%arg0: i32, %arg1: i32) -> (i32, i32) {
    %c0_i32 = arith.constant 0 : i32
    %c0_i32_0 = arith.constant 0 : i32
    return %arg1, %c0_i32 : i32, i32
  }
  func.func @transform_2(%arg0: i32, %arg1: i32) -> (i32, i32) {
    %c0_i32 = arith.constant 0 : i32
    %c0_i32_0 = arith.constant 0 : i32
    %c0_i32_1 = arith.constant 0 : i32
    return %c0_i32, %c0_i32_0 : i32, i32
  }
  func.func @transform_3(%arg0: i32, %arg1: i32) -> (i32, i32) {
    %c0_i32 = arith.constant 0 : i32
    %c0_i32_0 = arith.constant 0 : i32
    return %arg0, %c0_i32 : i32, i32
  }
  func.func @transform_4(%arg0: i32, %arg1: i32) -> (i32, i32) {
    %c0_i32 = arith.constant 0 : i32
    %c0_i32_0 = arith.constant 0 : i32
    return %arg0, %c0_i32 : i32, i32
  }
}

</mosaic_0001>

<llo_original>
// kernel: _gat_forward_impl.5
$region0: #{_gat_forward_impl.5}
  #allocation0 [shape = 'u32[]', space=smem, size = 0x4, offset = 0x4, fixed_abs, tag = 'smem constant byte address 0x4 - core index']
  #allocation1 [shape = 'u32[144,128]{1,0:T(1,128)}', space=vmem, size = 0x12000, scoped, tag = 'internal scratch']
  #allocation2 [shape = 'f32[8,128]{1,0:T(8,128)}', space=vmem, size = 0x1000, scoped, tag = 'scratch operand']
  %s0 = inlined_call_operand.vmem [shape: bf16[8,8], index: 0, kind: input, shape index: {}]
  %s1 = inlined_call_operand.vmem [shape: bf16[8,128], index: 1, kind: input, shape index: {}]
  %s2 = inlined_call_operand.vmem [shape: f32[1,128], index: 2, kind: input, shape index: {}]
  %s3 = inlined_call_operand.vmem [shape: f32[8,1], index: 3, kind: input, shape index: {}]
  %s4 = inlined_call_operand.vmem [shape: f32[8,128], index: 4, kind: output, shape index: {}]
  %s5 = sld [smem:[#allocation0]]
  $region34: #{_gat_forward_impl.5} parent=0
    _
  %s7 = ssub.s32 1, %s5
  %s8 = scalar_select 0, %s7, %s5
  // Predicated region
  $region2: #{_gat_forward_impl.5} parent=0 // pred_check
    _
  $region3: #{_gat_forward_impl.5} parent=0 // pred_check_branch
    %10 = sbr.rel (0) target = $region5
  $region4: #{_gat_forward_impl.5} parent=0 // pred_region
    _
  $region5: #{_gat_forward_impl.5} parent=0 // pred_fallthru
    _
  // Predicated region
  $region6: #{_gat_forward_impl.5} parent=0 // pred_check
    _
  $region7: #{_gat_forward_impl.5} parent=0 // pred_check_branch
    %12 = sbr.rel (0) target = $region9
  $region8: #{_gat_forward_impl.5} parent=0 // pred_region
    _
  $region9: #{_gat_forward_impl.5} parent=0 // pred_fallthru
    _
  // Predicated region
  $region10: #{_gat_forward_impl.5} parent=0 // pred_check
    _
  $region11: #{_gat_forward_impl.5} parent=0 // pred_check_branch
    %14 = sbr.rel (0) target = $region13
  $region12: #{_gat_forward_impl.5} parent=0 // pred_region
    _
  $region13: #{_gat_forward_impl.5} parent=0 // pred_fallthru
    _
  // Predicated region
  $region14: #{_gat_forward_impl.5} parent=0 // pred_check
    _
  $region15: #{_gat_forward_impl.5} parent=0 // pred_check_branch
    %16 = sbr.rel (0) target = $region17
  $region16: #{_gat_forward_impl.5} parent=0 // pred_region
    _
  $region17: #{_gat_forward_impl.5} parent=0 // pred_fallthru
    _
  %p18 = scmp.eq.s32.totalorder 0, 0
  // Predicated region
  $region18: #{_gat_forward_impl.5} parent=0 // pred_check
    %p19 = pneg %p18
  $region19: #{_gat_forward_impl.5} parent=0 // pred_check_branch
    %21 = sbr.rel (%p19) target = $region21
  $region20: #{_gat_forward_impl.5} parent=0 // pred_region
    %22 = vst [vmem:[#allocation2] sm:$0xff] 0.0
  $region21: #{_gat_forward_impl.5} parent=0 // pred_fallthru
    _
  %v23 = vld [vmem:[#allocation2] sm:$0xff]
  %v24 = vld [vmem:[%s0] sm:$0xf]
  %v25 = vld [vmem:[%s1] sm:$0xf]
  %vm26 = vcmask 64512
  %v28 = vsel %vm26, %v24, 0
  %vm30 = vcmask 1043456
  %v32 = vsel %vm30, %v25, 0
  %34 = vmatprep.subr.bf16.mxu0 0
  %35 = vmatpush1.bf16.msra.mxu0 0
  %36 = vmatprep.subr.bf16.mxu0 0
  %37 = vmatpush1.bf16.msra.mxu0 0
  %38 = vmatprep.subr.bf16.mxu0 0
  %39 = vmatpush1.bf16.msra.mxu0 0
  %40 = vmatprep.subr.bf16.mxu0 0
  %41 = vmatpush1.bf16.msra.mxu0 0
  %42 = vmatprep.subr.bf16.mxu0 0
  %43 = vmatpush1.bf16.msra.mxu0 0
  %44 = vmatprep.subr.bf16.mxu0 0
  %45 = vmatpush1.bf16.msra.mxu0 0
  %46 = vmatprep.subr.bf16.mxu0 0
  %47 = vmatpush1.bf16.msra.mxu0 0
  %48 = vmatprep.subr.bf16.mxu0 0
  %49 = vmatpush1.bf16.msra.mxu0 %v32
  %50 = vmatprep.subr.bf16.mxu0 0
  %51 = vmatpush2.bf16.msra.mxu0 0
  %52 = vmatprep.subr.bf16.mxu0 0
  %53 = vmatpush2.bf16.msra.mxu0 0
  %54 = vmatprep.subr.bf16.mxu0 0
  %55 = vmatpush2.bf16.msra.mxu0 0
  %56 = vmatprep.subr.bf16.mxu0 0
  %57 = vmatpush2.bf16.msra.mxu0 0
  %58 = vmatprep.subr.bf16.mxu0 0
  %59 = vmatpush2.bf16.msra.mxu0 0
  %60 = vmatprep.subr.bf16.mxu0 0
  %61 = vmatpush2.bf16.msra.mxu0 0
  %62 = vmatprep.subr.bf16.mxu0 0
  %63 = vmatpush2.bf16.msra.mxu0 0
  %64 = vmatprep.subr.bf16.mxu0 0
  %65 = vmatpush2.bf16.msra.mxu0 0
  %66 = vmatprep.mubr.bf16.mxu0 0
  %67 = vmatmul.mubr.bf16.gmra.mxu0 %v28
  %v68 = vpop.f32.mrf.mxu0
  %v69 = vadd.f32 0.0, %v68
  %v70 = vpop.f32.mrf.mxu0
  %v71 = vpop.f32.mrf.mxu0
  %v72 = vpop.f32.mrf.mxu0
  %73 = vdwg.mxu0
  %v74 = vadd.f32 %v23, %v69
  %75 = vst [vmem:[#allocation2] sm:$0xff] %v74
  // Predicated region
  $region22: #{_gat_forward_impl.5} parent=0 // pred_check
    %p76 = pneg %p18
  $region23: #{_gat_forward_impl.5} parent=0 // pred_check_branch
    %78 = sbr.rel (%p76) target = $region25
  $region24: #{_gat_forward_impl.5} parent=0 // pred_region
    %v79 = vld [vmem:[%s3] sm:$0xff]
    %v80 = vld [vmem:[#allocation2] sm:$0xff]
    %82 = vset.pattern.permute.xlu0 0
    %83 = vperm.xlu0 %82, %v79
    %v84 = vpop.permute.xlu0 %83
    %v86 = vmul.f32 %v84, %v80
    %v87 = vld [vmem:[%s2] sm:$0x1]
    %v89 = vlaneseq
    %v90 = vshrl.u32 %v89, 7
    %v91 = vsub.s32 0, %v90
    %v92 = vrot.slane %v87, %v91
    %v94 = vadd.f32 %v86, %v92
    %95 = vmax.xlane.f32.xlu0 %v94
    %v96 = vpop.xlane.xlu0 %95
    %v97 = vsub.f32 %v94, %v96
    %v98 = vmul.f32 %v97, 1.442695
    %v99 = vpow.pop %v98
    %100 = vadd.xlane.f32.xlu0 %v99
    %v101 = vpop.xlane.xlu0 %100
    %v102 = vlog2.pop %v101
    %v103 = vmul.f32 %v102, 0.6931472
    %v104 = vsub.f32 %v97, %v103
    %105 = vst [vmem:[%s4] sm:$0xff] %v104
  $region25: #{_gat_forward_impl.5} parent=0 // pred_fallthru
    _
  // Predicated region
  $region26: #{_gat_forward_impl.5} parent=0 // pred_check
    _
  $region27: #{_gat_forward_impl.5} parent=0 // pred_check_branch
    %107 = sbr.rel (0) target = $region29
  $region28: #{_gat_forward_impl.5} parent=0 // pred_region
    _
  $region29: #{_gat_forward_impl.5} parent=0 // pred_fallthru
    _
  // Predicated region
  $region30: #{_gat_forward_impl.5} parent=0 // pred_check
    _
  $region31: #{_gat_forward_impl.5} parent=0 // pred_check_branch
    %109 = sbr.rel (0) target = $region33
  $region32: #{_gat_forward_impl.5} parent=0 // pred_region
    _
  $region33: #{_gat_forward_impl.5} parent=0 // pred_fallthru
    _

// kernel: _gat_forward_impl.3
$region0: #{_gat_forward_impl.3}
  #allocation0 [shape = 'u32[]', space=smem, size = 0x4, offset = 0x4, fixed_abs, tag = 'smem constant byte address 0x4 - core index']
  #allocation1 [shape = 'u32[144,128]{1,0:T(1,128)}', space=vmem, size = 0x12000, scoped, tag = 'internal scratch']
  %s0 = inlined_call_operand.vmem [shape: f32[8,16], index: 0, kind: input, shape index: {}]
  %s1 = inlined_call_operand.vmem [shape: f32[16,32], index: 1, kind: input, shape index: {}]
  %s2 = inlined_call_operand.vmem [shape: f32[2,32], index: 2, kind: input, shape index: {}]
  %s3 = inlined_call_operand.vmem [shape: f32[2,32], index: 3, kind: input, shape index: {}]
  %s4 = inlined_call_operand.vmem [shape: bf16[8,32], index: 4, kind: output, shape index: {0}]
  %s5 = inlined_call_operand.vmem [shape: f32[2,8], index: 5, kind: output, shape index: {1}]
  %s6 = inlined_call_operand.vmem [shape: f32[8,2], index: 6, kind: output, shape index: {2}]
  %7 = xla_tuple %s4, %s5, %s6
  %s8 = sld [smem:[#allocation0]]
  $region42: #{_gat_forward_impl.3} parent=0
    _
  %s10 = ssub.s32 1, %s8
  %s11 = scalar_select 0, %s10, %s8
  // Predicated region
  $region2: #{_gat_forward_impl.3} parent=0 // pred_check
    _
  $region3: #{_gat_forward_impl.3} parent=0 // pred_check_branch
    %13 = sbr.rel (0) target = $region5
  $region4: #{_gat_forward_impl.3} parent=0 // pred_region
    _
  $region5: #{_gat_forward_impl.3} parent=0 // pred_fallthru
    _
  // Predicated region
  $region6: #{_gat_forward_impl.3} parent=0 // pred_check
    _
  $region7: #{_gat_forward_impl.3} parent=0 // pred_check_branch
    %15 = sbr.rel (0) target = $region9
  $region8: #{_gat_forward_impl.3} parent=0 // pred_region
    _
  $region9: #{_gat_forward_impl.3} parent=0 // pred_fallthru
    _
  // Predicated region
  $region10: #{_gat_forward_impl.3} parent=0 // pred_check
    _
  $region11: #{_gat_forward_impl.3} parent=0 // pred_check_branch
    %17 = sbr.rel (0) target = $region13
  $region12: #{_gat_forward_impl.3} parent=0 // pred_region
    _
  $region13: #{_gat_forward_impl.3} parent=0 // pred_fallthru
    _
  // Predicated region
  $region14: #{_gat_forward_impl.3} parent=0 // pred_check
    _
  $region15: #{_gat_forward_impl.3} parent=0 // pred_check_branch
    %19 = sbr.rel (0) target = $region17
  $region16: #{_gat_forward_impl.3} parent=0 // pred_region
    _
  $region17: #{_gat_forward_impl.3} parent=0 // pred_fallthru
    _
  %v20 = vld [vmem:[%s0] sm:$0xff]
  %v21 = vld [vmem:[%s1] sm:$0xff]
  %v22 = vld [vmem:[%s1 + $0x8] sm:$0xff]
  %vm23 = vcmask 130048
  %v25 = vsel %vm23, %v20, 0
  %27 = vmatprep.subr.mxu0 0.0
  %28 = vmatpush1.msra.mxu0 0.0
  %29 = vmatprep.subr.mxu0 0.0
  %30 = vmatpush1.msra.mxu0 0.0
  %31 = vmatprep.subr.mxu0 0.0
  %32 = vmatpush1.msra.mxu0 0.0
  %33 = vmatprep.subr.mxu0 0.0
  %34 = vmatpush1.msra.mxu0 0.0
  %35 = vmatprep.subr.mxu0 0.0
  %36 = vmatpush1.msra.mxu0 0.0
  %37 = vmatprep.subr.mxu0 0.0
  %38 = vmatpush1.msra.mxu0 0.0
  %39 = vmatprep.subr.mxu0 0.0
  %40 = vmatpush1.msra.mxu0 0.0
  %41 = vmatprep.subr.mxu0 0.0
  %42 = vmatpush1.msra.mxu0 0.0
  %43 = vmatprep.subr.mxu0 0.0
  %44 = vmatpush1.msra.mxu0 0.0
  %45 = vmatprep.subr.mxu0 0.0
  %46 = vmatpush1.msra.mxu0 0.0
  %47 = vmatprep.subr.mxu0 0.0
  %48 = vmatpush1.msra.mxu0 0.0
  %49 = vmatprep.subr.mxu0 0.0
  %50 = vmatpush1.msra.mxu0 0.0
  %51 = vmatprep.subr.mxu0 0.0
  %52 = vmatpush1.msra.mxu0 0.0
  %53 = vmatprep.subr.mxu0 0.0
  %54 = vmatpush1.msra.mxu0 0.0
  %55 = vmatprep.subr.mxu0 0.0
  %56 = vmatpush1.msra.mxu0 %v22
  %57 = vmatprep.subr.mxu0 0.0
  %58 = vmatpush1.msra.mxu0 %v21
  %59 = vmatprep.subr.mxu0 0.0
  %60 = vmatpush2.msra.mxu0 0.0
  %61 = vmatprep.subr.mxu0 0.0
  %62 = vmatpush2.msra.mxu0 0.0
  %63 = vmatprep.subr.mxu0 0.0
  %64 = vmatpush2.msra.mxu0 0.0
  %65 = vmatprep.subr.mxu0 0.0
  %66 = vmatpush2.msra.mxu0 0.0
  %67 = vmatprep.subr.mxu0 0.0
  %68 = vmatpush2.msra.mxu0 0.0
  %69 = vmatprep.subr.mxu0 0.0
  %70 = vmatpush2.msra.mxu0 0.0
  %71 = vmatprep.subr.mxu0 0.0
  %72 = vmatpush2.msra.mxu0 0.0
  %73 = vmatprep.subr.mxu0 0.0
  %74 = vmatpush2.msra.mxu0 0.0
  %75 = vmatprep.subr.mxu0 0.0
  %76 = vmatpush2.msra.mxu0 0.0
  %77 = vmatprep.subr.mxu0 0.0
  %78 = vmatpush2.msra.mxu0 0.0
  %79 = vmatprep.subr.mxu0 0.0
  %80 = vmatpush2.msra.mxu0 0.0
  %81 = vmatprep.subr.mxu0 0.0
  %82 = vmatpush2.msra.mxu0 0.0
  %83 = vmatprep.subr.mxu0 0.0
  %84 = vmatpush2.msra.mxu0 0.0
  %85 = vmatprep.subr.mxu0 0.0
  %86 = vmatpush2.msra.mxu0 0.0
  %87 = vmatprep.subr.mxu0 0.0
  %88 = vmatpush2.msra.mxu0 0.0
  %89 = vmatprep.subr.mxu0 0.0
  %90 = vmatpush2.msra.mxu0 0.0
  %91 = vmatprep.mubr.f32.mxu0 0.0
  %92 = vmatmul.mubr.f32.gmra.mxu0 %v25
  %v93 = vpop.f32.mrf.mxu0
  %v94 = vadd.f32 0.0, %v93
  %v95 = vpop.f32.mrf.mxu0
  %96 = vdwg.mxu0
  %v97 = vpack.c.bf16 %v94, %v94
  %vm98 = vcmask 257024
  %99 = vst.msk [vmem:[%s4] sm:$0xf] %vm98, %v97
  %v100 = vld [vmem:[%s2] sm:$0x3]
  %vm101 = vcmask 261120
  %v103 = vsel %vm101, %v100, 0
  %v106 = vsel %vm101, %v94, 0
  %108 = vmatprep.subr.mxu0 0.0
  %109 = vmatpush1.xpose.msra.mxu0 0.0
  %110 = vmatprep.subr.mxu0 0.0
  %111 = vmatpush1.xpose.msra.mxu0 0.0
  %112 = vmatprep.subr.mxu0 0.0
  %113 = vmatpush1.xpose.msra.mxu0 0.0
  %114 = vmatprep.subr.mxu0 0.0
  %115 = vmatpush1.xpose.msra.mxu0 0.0
  %116 = vmatprep.subr.mxu0 0.0
  %117 = vmatpush1.xpose.msra.mxu0 0.0
  %118 = vmatprep.subr.mxu0 0.0
  %119 = vmatpush1.xpose.msra.mxu0 0.0
  %120 = vmatprep.subr.mxu0 0.0
  %121 = vmatpush1.xpose.msra.mxu0 0.0
  %122 = vmatprep.subr.mxu0 0.0
  %123 = vmatpush1.xpose.msra.mxu0 0.0
  %124 = vmatprep.subr.mxu0 0.0
  %125 = vmatpush1.xpose.msra.mxu0 0.0
  %126 = vmatprep.subr.mxu0 0.0
  %127 = vmatpush1.xpose.msra.mxu0 0.0
  %128 = vmatprep.subr.mxu0 0.0
  %129 = vmatpush1.xpose.msra.mxu0 0.0
  %130 = vmatprep.subr.mxu0 0.0
  %131 = vmatpush1.xpose.msra.mxu0 0.0
  %132 = vmatprep.subr.mxu0 0.0
  %133 = vmatpush1.xpose.msra.mxu0 0.0
  %134 = vmatprep.subr.mxu0 0.0
  %135 = vmatpush1.xpose.msra.mxu0 0.0
  %136 = vmatprep.subr.mxu0 0.0
  %137 = vmatpush1.xpose.msra.mxu0 0.0
  %138 = vmatprep.subr.mxu0 0.0
  %139 = vmatpush1.xpose.msra.mxu0 %v106
  %140 = vmatprep.subr.mxu0 0.0
  %141 = vmatpush2.xpose.msra.mxu0 0.0
  %142 = vmatprep.subr.mxu0 0.0
  %143 = vmatpush2.xpose.msra.mxu0 0.0
  %144 = vmatprep.subr.mxu0 0.0
  %145 = vmatpush2.xpose.msra.mxu0 0.0
  %146 = vmatprep.subr.mxu0 0.0
  %147 = vmatpush2.xpose.msra.mxu0 0.0
  %148 = vmatprep.subr.mxu0 0.0
  %149 = vmatpush2.xpose.msra.mxu0 0.0
  %150 = vmatprep.subr.mxu0 0.0
  %151 = vmatpush2.xpose.msra.mxu0 0.0
  %152 = vmatprep.subr.mxu0 0.0
  %153 = vmatpush2.xpose.msra.mxu0 0.0
  %154 = vmatprep.subr.mxu0 0.0
  %155 = vmatpush2.xpose.msra.mxu0 0.0
  %156 = vmatprep.subr.mxu0 0.0
  %157 = vmatpush2.xpose.msra.mxu0 0.0
  %158 = vmatprep.subr.mxu0 0.0
  %159 = vmatpush2.xpose.msra.mxu0 0.0
  %160 = vmatprep.subr.mxu0 0.0
  %161 = vmatpush2.xpose.msra.mxu0 0.0
  %162 = vmatprep.subr.mxu0 0.0
  %163 = vmatpush2.xpose.msra.mxu0 0.0
  %164 = vmatprep.subr.mxu0 0.0
  %165 = vmatpush2.xpose.msra.mxu0 0.0
  %166 = vmatprep.subr.mxu0 0.0
  %167 = vmatpush2.xpose.msra.mxu0 0.0
  %168 = vmatprep.subr.mxu0 0.0
  %169 = vmatpush2.xpose.msra.mxu0 0.0
  %170 = vmatprep.subr.mxu0 0.0
  %171 = vmatpush2.xpose.msra.mxu0 0.0
  %172 = vmatprep.mubr.f32.mxu0 0.0
  %173 = vmatmul.mubr.f32.gmra.mxu0 %v103
  %v174 = vpop.f32.mrf.mxu0
  %v175 = vadd.f32 0.0, %v174
  %v176 = vpop.f32.mrf.mxu0
  %177 = vdwg.mxu0
  %vm178 = vcmask 58368
  %179 = vst.msk [vmem:[%s5] sm:$0x3] %vm178, %v175
  %v180 = vld [vmem:[%s3] sm:$0x3]
  %v182 = vsel %vm101, %v180, 0
  %184 = vmatprep.subr.mxu0 0.0
  %185 = vmatpush1.xpose.msra.mxu0 0.0
  %186 = vmatprep.subr.mxu0 0.0
  %187 = vmatpush1.xpose.msra.mxu0 0.0
  %188 = vmatprep.subr.mxu0 0.0
  %189 = vmatpush1.xpose.msra.mxu0 0.0
  %190 = vmatprep.subr.mxu0 0.0
  %191 = vmatpush1.xpose.msra.mxu0 0.0
  %192 = vmatprep.subr.mxu0 0.0
  %193 = vmatpush1.xpose.msra.mxu0 0.0
  %194 = vmatprep.subr.mxu0 0.0
  %195 = vmatpush1.xpose.msra.mxu0 0.0
  %196 = vmatprep.subr.mxu0 0.0
  %197 = vmatpush1.xpose.msra.mxu0 0.0
  %198 = vmatprep.subr.mxu0 0.0
  %199 = vmatpush1.xpose.msra.mxu0 0.0
  %200 = vmatprep.subr.mxu0 0.0
  %201 = vmatpush1.xpose.msra.mxu0 0.0
  %202 = vmatprep.subr.mxu0 0.0
  %203 = vmatpush1.xpose.msra.mxu0 0.0
  %204 = vmatprep.subr.mxu0 0.0
  %205 = vmatpush1.xpose.msra.mxu0 0.0
  %206 = vmatprep.subr.mxu0 0.0
  %207 = vmatpush1.xpose.msra.mxu0 0.0
  %208 = vmatprep.subr.mxu0 0.0
  %209 = vmatpush1.xpose.msra.mxu0 0.0
  %210 = vmatprep.subr.mxu0 0.0
  %211 = vmatpush1.xpose.msra.mxu0 0.0
  %212 = vmatprep.subr.mxu0 0.0
  %213 = vmatpush1.xpose.msra.mxu0 0.0
  %214 = vmatprep.subr.mxu0 0.0
  %215 = vmatpush1.xpose.msra.mxu0 %v182
  %216 = vmatprep.subr.mxu0 0.0
  %217 = vmatpush2.xpose.msra.mxu0 0.0
  %218 = vmatprep.subr.mxu0 0.0
  %219 = vmatpush2.xpose.msra.mxu0 0.0
  %220 = vmatprep.subr.mxu0 0.0
  %221 = vmatpush2.xpose.msra.mxu0 0.0
  %222 = vmatprep.subr.mxu0 0.0
  %223 = vmatpush2.xpose.msra.mxu0 0.0
  %224 = vmatprep.subr.mxu0 0.0
  %225 = vmatpush2.xpose.msra.mxu0 0.0
  %226 = vmatprep.subr.mxu0 0.0
  %227 = vmatpush2.xpose.msra.mxu0 0.0
  %228 = vmatprep.subr.mxu0 0.0
  %229 = vmatpush2.xpose.msra.mxu0 0.0
  %230 = vmatprep.subr.mxu0 0.0
  %231 = vmatpush2.xpose.msra.mxu0 0.0
  %232 = vmatprep.subr.mxu0 0.0
  %233 = vmatpush2.xpose.msra.mxu0 0.0
  %234 = vmatprep.subr.mxu0 0.0
  %235 = vmatpush2.xpose.msra.mxu0 0.0
  %236 = vmatprep.subr.mxu0 0.0
  %237 = vmatpush2.xpose.msra.mxu0 0.0
  %238 = vmatprep.subr.mxu0 0.0
  %239 = vmatpush2.xpose.msra.mxu0 0.0
  %240 = vmatprep.subr.mxu0 0.0
  %241 = vmatpush2.xpose.msra.mxu0 0.0
  %242 = vmatprep.subr.mxu0 0.0
  %243 = vmatpush2.xpose.msra.mxu0 0.0
  %244 = vmatprep.subr.mxu0 0.0
  %245 = vmatpush2.xpose.msra.mxu0 0.0
  %246 = vmatprep.subr.mxu0 0.0
  %247 = vmatpush2.xpose.msra.mxu0 0.0
  %248 = vmatprep.mubr.f32.mxu0 0.0
  %249 = vmatmul.mubr.f32.gmra.mxu0 %v106
  %v250 = vpop.f32.mrf.mxu0
  %v251 = vadd.f32 0.0, %v250
  %v252 = vpop.f32.mrf.mxu0
  %253 = vdwg.mxu0
  %vm254 = vcmask 15360
  %255 = vst.msk [vmem:[%s6] sm:$0xff] %vm254, %v251
  // Predicated region
  $region18: #{_gat_forward_impl.3} parent=0 // pred_check
    _
  $region19: #{_gat_forward_impl.3} parent=0 // pred_check_branch
    %257 = sbr.rel (0) target = $region21
  $region20: #{_gat_forward_impl.3} parent=0 // pred_region
    _
  $region21: #{_gat_forward_impl.3} parent=0 // pred_fallthru
    _
  // Predicated region
  $region22: #{_gat_forward_impl.3} parent=0 // pred_check
    _
  $region23: #{_gat_forward_impl.3} parent=0 // pred_check_branch
    %259 = sbr.rel (0) target = $region25
  $region24: #{_gat_forward_impl.3} parent=0 // pred_region
    _
  $region25: #{_gat_forward_impl.3} parent=0 // pred_fallthru
    _
  // Predicated region
  $region26: #{_gat_forward_impl.3} parent=0 // pred_check
    _
  $region27: #{_gat_forward_impl.3} parent=0 // pred_check_branch
    %261 = sbr.rel (0) target = $region29
  $region28: #{_gat_forward_impl.3} parent=0 // pred_region
    _
  $region29: #{_gat_forward_impl.3} parent=0 // pred_fallthru
    _
  // Predicated region
  $region30: #{_gat_forward_impl.3} parent=0 // pred_check
    _
  $region31: #{_gat_forward_impl.3} parent=0 // pred_check_branch
    %263 = sbr.rel (0) target = $region33
  $region32: #{_gat_forward_impl.3} parent=0 // pred_region
    _
  $region33: #{_gat_forward_impl.3} parent=0 // pred_fallthru
    _
  // Predicated region
  $region34: #{_gat_forward_impl.3} parent=0 // pred_check
    _
  $region35: #{_gat_forward_impl.3} parent=0 // pred_check_branch
    %265 = sbr.rel (0) target = $region37
  $region36: #{_gat_forward_impl.3} parent=0 // pred_region
    _
  $region37: #{_gat_forward_impl.3} parent=0 // pred_fallthru
    _
  // Predicated region
  $region38: #{_gat_forward_impl.3} parent=0 // pred_check
    _
  $region39: #{_gat_forward_impl.3} parent=0 // pred_check_branch
    %267 = sbr.rel (0) target = $region41
  $region40: #{_gat_forward_impl.3} parent=0 // pred_region
    _
  $region41: #{_gat_forward_impl.3} parent=0 // pred_fallthru
    _

// kernel: _gat_forward_impl.4
$region0: #{_gat_forward_impl.4}
  #allocation0 [shape = 'u32[]', space=smem, size = 0x4, offset = 0x4, fixed_abs, tag = 'smem constant byte address 0x4 - core index']
  #allocation1 [shape = 'u32[144,128]{1,0:T(1,128)}', space=vmem, size = 0x12000, scoped, tag = 'internal scratch']
  #allocation2 [shape = 'f32[2,8,1]{2,1,0:T(8,128)}', space=vmem, size = 0x2000, scoped, tag = 'scratch operand']
  #allocation3 [shape = 'f32[2,8,1]{2,1,0:T(8,128)}', space=vmem, size = 0x2000, scoped, tag = 'scratch operand']
  #allocation4 [shape = 'f32[8,32]{1,0:T(8,128)}', space=vmem, size = 0x1000, scoped, tag = 'scratch operand']
  %s0 = inlined_call_operand.vmem [shape: bf16[8,8], index: 0, kind: input, shape index: {}]
  %s1 = inlined_call_operand.vmem [shape: bf16[8,32], index: 1, kind: input, shape index: {}]
  %s2 = inlined_call_operand.vmem [shape: f32[2,8], index: 2, kind: input, shape index: {}]
  %s3 = inlined_call_operand.vmem [shape: f32[8,2], index: 3, kind: input, shape index: {}]
  %s4 = inlined_call_operand.vmem [shape: f32[1,32], index: 4, kind: input, shape index: {}]
  %s5 = inlined_call_operand.vmem [shape: f32[32,128], index: 5, kind: input, shape index: {}]
  %s6 = inlined_call_operand.vmem [shape: f32[8,1], index: 6, kind: input, shape index: {}]
  %s7 = inlined_call_operand.vmem [shape: bf16[8,128], index: 7, kind: output, shape index: {}]
  %s8 = sld [smem:[#allocation0]]
  $region46: #{_gat_forward_impl.4} parent=0
    _
  %s10 = ssub.s32 1, %s8
  %s11 = scalar_select 0, %s10, %s8
  // Predicated region
  $region2: #{_gat_forward_impl.4} parent=0 // pred_check
    _
  $region3: #{_gat_forward_impl.4} parent=0 // pred_check_branch
    %13 = sbr.rel (0) target = $region5
  $region4: #{_gat_forward_impl.4} parent=0 // pred_region
    _
  $region5: #{_gat_forward_impl.4} parent=0 // pred_fallthru
    _
  // Predicated region
  $region6: #{_gat_forward_impl.4} parent=0 // pred_check
    _
  $region7: #{_gat_forward_impl.4} parent=0 // pred_check_branch
    %15 = sbr.rel (0) target = $region9
  $region8: #{_gat_forward_impl.4} parent=0 // pred_region
    _
  $region9: #{_gat_forward_impl.4} parent=0 // pred_fallthru
    _
  // Predicated region
  $region10: #{_gat_forward_impl.4} parent=0 // pred_check
    _
  $region11: #{_gat_forward_impl.4} parent=0 // pred_check_branch
    %17 = sbr.rel (0) target = $region13
  $region12: #{_gat_forward_impl.4} parent=0 // pred_region
    _
  $region13: #{_gat_forward_impl.4} parent=0 // pred_fallthru
    _
  // Predicated region
  $region14: #{_gat_forward_impl.4} parent=0 // pred_check
    _
  $region15: #{_gat_forward_impl.4} parent=0 // pred_check_branch
    %19 = sbr.rel (0) target = $region17
  $region16: #{_gat_forward_impl.4} parent=0 // pred_region
    _
  $region17: #{_gat_forward_impl.4} parent=0 // pred_fallthru
    _
  // Predicated region
  $region18: #{_gat_forward_impl.4} parent=0 // pred_check
    _
  $region19: #{_gat_forward_impl.4} parent=0 // pred_check_branch
    %21 = sbr.rel (0) target = $region21
  $region20: #{_gat_forward_impl.4} parent=0 // pred_region
    _
  $region21: #{_gat_forward_impl.4} parent=0 // pred_fallthru
    _
  // Predicated region
  $region22: #{_gat_forward_impl.4} parent=0 // pred_check
    _
  $region23: #{_gat_forward_impl.4} parent=0 // pred_check_branch
    %23 = sbr.rel (0) target = $region25
  $region24: #{_gat_forward_impl.4} parent=0 // pred_region
    _
  $region25: #{_gat_forward_impl.4} parent=0 // pred_fallthru
    _
  // Predicated region
  $region26: #{_gat_forward_impl.4} parent=0 // pred_check
    _
  $region27: #{_gat_forward_impl.4} parent=0 // pred_check_branch
    %25 = sbr.rel (0) target = $region29
  $region28: #{_gat_forward_impl.4} parent=0 // pred_region
    _
  $region29: #{_gat_forward_impl.4} parent=0 // pred_fallthru
    _
  %p27 = scmp.eq.s32.totalorder 0, 0
  // Predicated region
  $region30: #{_gat_forward_impl.4} parent=0 // pred_check
    %p28 = pneg %p27
  $region31: #{_gat_forward_impl.4} parent=0 // pred_check_branch
    %30 = sbr.rel (%p28) target = $region33
  $region32: #{_gat_forward_impl.4} parent=0 // pred_region
    %vm31 = vcmask 7168
    %32 = vst.msk [vmem:[#allocation2] sm:$0xff] %vm31, -inf
    %33 = vst.msk [vmem:[#allocation2 + $0x8] sm:$0xff] %vm31, -inf
    %34 = vst.msk [vmem:[#allocation3] sm:$0xff] %vm31, 0.0
    %35 = vst.msk [vmem:[#allocation3 + $0x8] sm:$0xff] %vm31, 0.0
    %vm36 = vcmask 261120
    %37 = vst.msk [vmem:[#allocation4] sm:$0xff] %vm36, 0.0
  $region33: #{_gat_forward_impl.4} parent=0 // pred_fallthru
    _
  %v38 = vld [vmem:[%s0] sm:$0xf]
  %v39 = vld [vmem:[%s1] sm:$0xf]
  %v40 = vld [vmem:[%s3] sm:$0xff]
  %v41 = vld [vmem:[%s2] sm:$0x1]
  %43 = vset.pattern.permute.xlu0 0
  %44 = vperm.xlu0 %43, %v40
  %v45 = vpop.permute.xlu0 %44
  %v47 = vlaneseq
  %v48 = vshrl.u32 %v47, 7
  %v49 = vsub.s32 0, %v48
  %v50 = vrot.slane %v41, %v49
  %v51 = vadd.f32 %v45, %v50
  %v52 = vmul.f32 %v51, 0.2
  %v53 = vmax.f32 %v51, %v52
  %v54 = vld [vmem:[#allocation2] sm:$0xff]
  %vm55 = vcmask 64512
  %v56 = vsel %vm55, %v53, -inf
  %57 = vmax.xlane.f32.xlu0 %v56
  %v58 = vpop.xlane.xlu0 %57
  %v59 = vmax.f32 %v54, %v58
  %v60 = vsub.f32 %v54, %v59
  %v61 = vmul.f32 %v60, 1.442695
  %v62 = vpow.pop %v61
  %64 = vset.pattern.permute.xlu0 0
  %65 = vperm.xlu0 %64, %v59
  %v66 = vpop.permute.xlu0 %65
  %v68 = vsub.f32 %v53, %v66
  %v69 = vpack.c.bf16 %v68, %v68
  %v71 = vmul.bf16 %v69, 1069105081
  %v72 = vpow.bf16.pop %v71
  %v73 = vmul.bf16 %v38, %v72
  %v74 = vunpack.c.l.bf16 %v73
  %v75 = vsel %vm55, %v74, 0.0
  %76 = vadd.xlane.f32.xlu0 %v75
  %v77 = vpop.xlane.xlu0 %76
  %v78 = vld [vmem:[#allocation3] sm:$0xff]
  %v79 = vmul.f32 %v62, %v78
  %v80 = vadd.f32 %v79, %v77
  %vm81 = vcmask 7168
  %82 = vst.msk [vmem:[#allocation3] sm:$0xff] %vm81, %v80
  %83 = vst.msk [vmem:[#allocation2] sm:$0xff] %vm81, %v59
  %v85 = vsel %vm55, %v73, 0
  %vm87 = vcmask 1043456
  %v89 = vsel %vm87, %v39, 0
  %91 = vmatprep.subr.bf16.mxu0 0
  %92 = vmatpush1.bf16.msra.mxu0 0
  %93 = vmatprep.subr.bf16.mxu0 0
  %94 = vmatpush1.bf16.msra.mxu0 0
  %95 = vmatprep.subr.bf16.mxu0 0
  %96 = vmatpush1.bf16.msra.mxu0 0
  %97 = vmatprep.subr.bf16.mxu0 0
  %98 = vmatpush1.bf16.msra.mxu0 0
  %99 = vmatprep.subr.bf16.mxu0 0
  %100 = vmatpush1.bf16.msra.mxu0 0
  %101 = vmatprep.subr.bf16.mxu0 0
  %102 = vmatpush1.bf16.msra.mxu0 0
  %103 = vmatprep.subr.bf16.mxu0 0
  %104 = vmatpush1.bf16.msra.mxu0 0
  %105 = vmatprep.subr.bf16.mxu0 0
  %106 = vmatpush1.bf16.msra.mxu0 %v89
  %107 = vmatprep.subr.bf16.mxu0 0
  %108 = vmatpush2.bf16.msra.mxu0 0
  %109 = vmatprep.subr.bf16.mxu0 0
  %110 = vmatpush2.bf16.msra.mxu0 0
  %111 = vmatprep.subr.bf16.mxu0 0
  %112 = vmatpush2.bf16.msra.mxu0 0
  %113 = vmatprep.subr.bf16.mxu0 0
  %114 = vmatpush2.bf16.msra.mxu0 0
  %115 = vmatprep.subr.bf16.mxu0 0
  %116 = vmatpush2.bf16.msra.mxu0 0
  %117 = vmatprep.subr.bf16.mxu0 0
  %118 = vmatpush2.bf16.msra.mxu0 0
  %119 = vmatprep.subr.bf16.mxu0 0
  %120 = vmatpush2.bf16.msra.mxu0 0
  %121 = vmatprep.subr.bf16.mxu0 0
  %122 = vmatpush2.bf16.msra.mxu0 0
  %123 = vmatprep.mubr.bf16.mxu0 0
  %124 = vmatmul.mubr.bf16.gmra.mxu0 %v85
  %v125 = vpop.f32.mrf.mxu0
  %v126 = vadd.f32 0.0, %v125
  %v127 = vpop.f32.mrf.mxu0
  %v128 = vpop.f32.mrf.mxu0
  %v129 = vpop.f32.mrf.mxu0
  %130 = vdwg.mxu0
  %v131 = vld [vmem:[#allocation4] sm:$0xff]
  %133 = vset.pattern.permute.xlu0 0
  %134 = vperm.xlu0 %133, %v62
  %v135 = vpop.permute.xlu0 %134
  %v137 = vmul.f32 %v135, %v131
  %v138 = vadd.f32 %v137, %v126
  %vm139 = vcmask 130048
  %140 = vst.msk [vmem:[#allocation4] sm:$0xff] %vm139, %v138
  %v141 = vld [vmem:[%s3] sm:$0xff]
  %v142 = vld [vmem:[%s2 + $0x1] sm:$0x1]
  %144 = vset.pattern.permute.xlu0 1
  %145 = vperm.xlu0 %144, %v141
  %v146 = vpop.permute.xlu0 %145
  %v148 = vlaneseq
  %v149 = vshrl.u32 %v148, 7
  %v150 = vsub.s32 0, %v149
  %v151 = vrot.slane %v142, %v150
  %v152 = vadd.f32 %v146, %v151
  %v153 = vmul.f32 %v152, 0.2
  %v154 = vmax.f32 %v152, %v153
  %s155 = scalar_lea.vmem [#allocation2], 8
  %v156 = vld [vmem:[%s155] sm:$0xff]
  %v157 = vsel %vm55, %v154, -inf
  %158 = vmax.xlane.f32.xlu0 %v157
  %v159 = vpop.xlane.xlu0 %158
  %v160 = vmax.f32 %v156, %v159
  %v161 = vsub.f32 %v156, %v160
  %v162 = vmul.f32 %v161, 1.442695
  %v163 = vpow.pop %v162
  %165 = vset.pattern.permute.xlu0 0
  %166 = vperm.xlu0 %165, %v160
  %v167 = vpop.permute.xlu0 %166
  %v169 = vsub.f32 %v154, %v167
  %v170 = vpack.c.bf16 %v169, %v169
  %v172 = vmul.bf16 %v170, 1069105081
  %v173 = vpow.bf16.pop %v172
  %v174 = vmul.bf16 %v38, %v173
  %v175 = vunpack.c.l.bf16 %v174
  %v176 = vsel %vm55, %v175, 0.0
  %177 = vadd.xlane.f32.xlu0 %v176
  %v178 = vpop.xlane.xlu0 %177
  %s179 = scalar_lea.vmem [#allocation3], 8
  %v180 = vld [vmem:[%s179] sm:$0xff]
  %v181 = vmul.f32 %v163, %v180
  %v182 = vadd.f32 %v181, %v178
  %183 = vst.msk [vmem:[%s179] sm:$0xff] %vm81, %v182
  %184 = vst.msk [vmem:[%s155] sm:$0xff] %vm81, %v160
  %v186 = vunpack.c.l.b16 %v39
  %v187 = vpack.c.b16 %v186, %v186
  %188 = vrot.lane.b32.xlu0 %v187, 112
  %v189 = vpop.permute.xlu0 %188
  %v191 = vsel %vm55, %v174, 0
  %v194 = vsel %vm87, %v189, 0
  %196 = vmatprep.subr.bf16.mxu0 0
  %197 = vmatpush1.bf16.msra.mxu0 0
  %198 = vmatprep.subr.bf16.mxu0 0
  %199 = vmatpush1.bf16.msra.mxu0 0
  %200 = vmatprep.subr.bf16.mxu0 0
  %201 = vmatpush1.bf16.msra.mxu0 0
  %202 = vmatprep.subr.bf16.mxu0 0
  %203 = vmatpush1.bf16.msra.mxu0 0
  %204 = vmatprep.subr.bf16.mxu0 0
  %205 = vmatpush1.bf16.msra.mxu0 0
  %206 = vmatprep.subr.bf16.mxu0 0
  %207 = vmatpush1.bf16.msra.mxu0 0
  %208 = vmatprep.subr.bf16.mxu0 0
  %209 = vmatpush1.bf16.msra.mxu0 0
  %210 = vmatprep.subr.bf16.mxu0 0
  %211 = vmatpush1.bf16.msra.mxu0 %v194
  %212 = vmatprep.subr.bf16.mxu0 0
  %213 = vmatpush2.bf16.msra.mxu0 0
  %214 = vmatprep.subr.bf16.mxu0 0
  %215 = vmatpush2.bf16.msra.mxu0 0
  %216 = vmatprep.subr.bf16.mxu0 0
  %217 = vmatpush2.bf16.msra.mxu0 0
  %218 = vmatprep.subr.bf16.mxu0 0
  %219 = vmatpush2.bf16.msra.mxu0 0
  %220 = vmatprep.subr.bf16.mxu0 0
  %221 = vmatpush2.bf16.msra.mxu0 0
  %222 = vmatprep.subr.bf16.mxu0 0
  %223 = vmatpush2.bf16.msra.mxu0 0
  %224 = vmatprep.subr.bf16.mxu0 0
  %225 = vmatpush2.bf16.msra.mxu0 0
  %226 = vmatprep.subr.bf16.mxu0 0
  %227 = vmatpush2.bf16.msra.mxu0 0
  %228 = vmatprep.mubr.bf16.mxu0 0
  %229 = vmatmul.mubr.bf16.gmra.mxu0 %v191
  %v230 = vpop.f32.mrf.mxu0
  %v231 = vadd.f32 0.0, %v230
  %v232 = vpop.f32.mrf.mxu0
  %v233 = vpop.f32.mrf.mxu0
  %v234 = vpop.f32.mrf.mxu0
  %235 = vdwg.mxu0
  %v236 = vld [vmem:[#allocation4] sm:$0xff]
  %238 = vset.pattern.permute.xlu0 0
  %239 = vperm.xlu0 %238, %v163
  %v240 = vpop.permute.xlu0 %239
  %v242 = vmul.f32 %v240, %v236
  %244 = vrot.lane.b32.xlu0 %v231, 16
  %v245 = vpop.permute.xlu0 %244
  %v247 = vadd.f32 %v242, %v245
  %vm248 = vcmask 261248
  %249 = vst.msk [vmem:[#allocation4] sm:$0xff] %vm248, %v247
  // Predicated region
  $region34: #{_gat_forward_impl.4} parent=0 // pred_check
    %p250 = pneg %p27
  $region35: #{_gat_forward_impl.4} parent=0 // pred_check_branch
    %252 = sbr.rel (%p250) target = $region37
  $region36: #{_gat_forward_impl.4} parent=0 // pred_region
    %v253 = vld [vmem:[#allocation3] sm:$0xff]
    %v254 = vmax.f32 %v253, 1e-20
    %v255 = vrcp.pop %v254
    %v256 = vld [vmem:[#allocation4] sm:$0xff]
    %258 = vset.pattern.permute.xlu0 0
    %259 = vperm.xlu0 %258, %v255
    %v260 = vpop.permute.xlu0 %259
    %v262 = vmul.f32 %v256, %v260
    %263 = vst.msk [vmem:[#allocation4] sm:$0xff] %vm139, %v262
    %v264 = vld [vmem:[%s179] sm:$0xff]
    %v265 = vmax.f32 %v264, 1e-20
    %v266 = vrcp.pop %v265
    %v267 = vld [vmem:[#allocation4] sm:$0xff]
    %269 = vset.pattern.permute.xlu0 0
    %270 = vperm.xlu0 %269, %v266
    %v271 = vpop.permute.xlu0 %270
    %v273 = vmul.f32 %v267, %v271
    %274 = vst.msk [vmem:[#allocation4] sm:$0xff] %vm248, %v273
    %v275 = vld [vmem:[#allocation4] sm:$0xff]
    %v276 = vld [vmem:[%s4] sm:$0x1]
    %v278 = vlaneseq
    %v279 = vshrl.u32 %v278, 7
    %v280 = vsub.s32 0, %v279
    %v281 = vrot.slane %v276, %v280
    %v283 = vadd.f32 %v275, %v281
    %v284 = vmax.f32 %v283, 0.0
    %v285 = vld [vmem:[%s5] sm:$0xff]
    %v286 = vld [vmem:[%s5 + $0x8] sm:$0xff]
    %v287 = vld [vmem:[%s5 + $0x10] sm:$0xff]
    %v288 = vld [vmem:[%s5 + $0x18] sm:$0xff]
    %vm289 = vcmask 261120
    %v291 = vsel %vm289, %v284, 0
    %293 = vmatprep.subr.mxu0 0.0
    %294 = vmatpush1.msra.mxu0 0.0
    %295 = vmatprep.subr.mxu0 0.0
    %296 = vmatpush1.msra.mxu0 0.0
    %297 = vmatprep.subr.mxu0 0.0
    %298 = vmatpush1.msra.mxu0 0.0
    %299 = vmatprep.subr.mxu0 0.0
    %300 = vmatpush1.msra.mxu0 0.0
    %301 = vmatprep.subr.mxu0 0.0
    %302 = vmatpush1.msra.mxu0 0.0
    %303 = vmatprep.subr.mxu0 0.0
    %304 = vmatpush1.msra.mxu0 0.0
    %305 = vmatprep.subr.mxu0 0.0
    %306 = vmatpush1.msra.mxu0 0.0
    %307 = vmatprep.subr.mxu0 0.0
    %308 = vmatpush1.msra.mxu0 0.0
    %309 = vmatprep.subr.mxu0 0.0
    %310 = vmatpush1.msra.mxu0 0.0
    %311 = vmatprep.subr.mxu0 0.0
    %312 = vmatpush1.msra.mxu0 0.0
    %313 = vmatprep.subr.mxu0 0.0
    %314 = vmatpush1.msra.mxu0 0.0
    %315 = vmatprep.subr.mxu0 0.0
    %316 = vmatpush1.msra.mxu0 0.0
    %317 = vmatprep.subr.mxu0 0.0
    %318 = vmatpush1.msra.mxu0 %v288
    %319 = vmatprep.subr.mxu0 0.0
    %320 = vmatpush1.msra.mxu0 %v287
    %321 = vmatprep.subr.mxu0 0.0
    %322 = vmatpush1.msra.mxu0 %v286
    %323 = vmatprep.subr.mxu0 0.0
    %324 = vmatpush1.msra.mxu0 %v285
    %325 = vmatprep.subr.mxu0 0.0
    %326 = vmatpush2.msra.mxu0 0.0
    %327 = vmatprep.subr.mxu0 0.0
    %328 = vmatpush2.msra.mxu0 0.0
    %329 = vmatprep.subr.mxu0 0.0
    %330 = vmatpush2.msra.mxu0 0.0
    %331 = vmatprep.subr.mxu0 0.0
    %332 = vmatpush2.msra.mxu0 0.0
    %333 = vmatprep.subr.mxu0 0.0
    %334 = vmatpush2.msra.mxu0 0.0
    %335 = vmatprep.subr.mxu0 0.0
    %336 = vmatpush2.msra.mxu0 0.0
    %337 = vmatprep.subr.mxu0 0.0
    %338 = vmatpush2.msra.mxu0 0.0
    %339 = vmatprep.subr.mxu0 0.0
    %340 = vmatpush2.msra.mxu0 0.0
    %341 = vmatprep.subr.mxu0 0.0
    %342 = vmatpush2.msra.mxu0 0.0
    %343 = vmatprep.subr.mxu0 0.0
    %344 = vmatpush2.msra.mxu0 0.0
    %345 = vmatprep.subr.mxu0 0.0
    %346 = vmatpush2.msra.mxu0 0.0
    %347 = vmatprep.subr.mxu0 0.0
    %348 = vmatpush2.msra.mxu0 0.0
    %349 = vmatprep.subr.mxu0 0.0
    %350 = vmatpush2.msra.mxu0 0.0
    %351 = vmatprep.subr.mxu0 0.0
    %352 = vmatpush2.msra.mxu0 0.0
    %353 = vmatprep.subr.mxu0 0.0
    %354 = vmatpush2.msra.mxu0 0.0
    %355 = vmatprep.subr.mxu0 0.0
    %356 = vmatpush2.msra.mxu0 0.0
    %357 = vmatprep.mubr.f32.mxu0 0.0
    %358 = vmatmul.mubr.f32.gmra.mxu0 %v291
    %v359 = vpop.f32.mrf.mxu0
    %v360 = vadd.f32 0.0, %v359
    %v361 = vpop.f32.mrf.mxu0
    %362 = vdwg.mxu0
    %v363 = vld [vmem:[%s6] sm:$0xff]
    %365 = vset.pattern.permute.xlu0 0
    %366 = vperm.xlu0 %365, %v363
    %v367 = vpop.permute.xlu0 %366
    %v369 = vmul.f32 %v360, %v367
    %v370 = vpack.c.bf16 %v369, %v369
    %371 = vst [vmem:[%s7] sm:$0xf] %v370
  $region37: #{_gat_forward_impl.4} parent=0 // pred_fallthru
    _
  // Predicated region
  $region38: #{_gat_forward_impl.4} parent=0 // pred_check
    _
  $region39: #{_gat_forward_impl.4} parent=0 // pred_check_branch
    %373 = sbr.rel (0) target = $region41
  $region40: #{_gat_forward_impl.4} parent=0 // pred_region
    _
  $region41: #{_gat_forward_impl.4} parent=0 // pred_fallthru
    _
  // Predicated region
  $region42: #{_gat_forward_impl.4} parent=0 // pred_check
    _
  $region43: #{_gat_forward_impl.4} parent=0 // pred_check_branch
    %375 = sbr.rel (0) target = $region45
  $region44: #{_gat_forward_impl.4} parent=0 // pred_region
    _
  $region45: #{_gat_forward_impl.4} parent=0 // pred_fallthru
    _

</llo_original>
